<compile_context>
chip_gen: v6e
topology: v6e:2x2x1
jax: 0.10.0
libtpu: 0.0.40
codegen_flags: <defaults>
</compile_context>

<pallas_src>
import functools

import jax
import jax.numpy as jnp
from jax.experimental import pallas as pl
from jax.experimental.pallas import tpu as pltpu


_MAX_SINGLE_K = 2048          # PatchEmbed K = C*P*P is tiny; always single step
_VMEM_BUDGET = 40 << 20       # keep working set well under v7x's 64 MiB / TC
_VMEM_LIMIT = 48 << 20        # scoped-VMEM limit passed to Mosaic
_TM_CANDIDATES = (2048, 1024, 512, 256, 128, 64, 32, 16, 8)


def _round_up(x, m):
    return ((x + m - 1) // m) * m


def _dot_precision(dtype):
    # f32 operands: force the exact multi-pass MXU algorithm (the kernel is
    # mem-bound, so the extra passes are hidden); bf16: native single pass.
    return (jax.lax.Precision.HIGHEST if dtype == jnp.float32
            else jax.lax.Precision.DEFAULT)


def _patch_embed_kernel(p_ref, w_ref, b_ref, o_ref, *, precision):
    """Single-K-step case: dot + fused bias + one lane-dense store."""
    acc = jnp.dot(p_ref[...], w_ref[...],
                  preferred_element_type=jnp.float32, precision=precision)
    o_ref[...] = (acc + b_ref[...]).astype(o_ref.dtype)


def _patch_embed_kernel_ktiled(p_ref, w_ref, b_ref, o_ref, acc_ref, *,
                               precision):
    """Fallback for K > _MAX_SINGLE_K: f32 accumulator over grid axis 1."""
    k = pl.program_id(1)

    @pl.when(k == 0)
    def _():
        acc_ref[...] = jnp.zeros_like(acc_ref)

    acc_ref[...] += jnp.dot(p_ref[...], w_ref[...],
                            preferred_element_type=jnp.float32,
                            precision=precision)

    @pl.when(k == pl.num_programs(1) - 1)
    def _():
        o_ref[...] = (acc_ref[...] + b_ref[...]).astype(o_ref.dtype)


def _extract_patches(x, patch_size):
    """(B, C, H, W) -> (B*num_patches, C*P*P).

    Per-patch flatten order is (c, kh, kw), matching nn.Conv2d's weight layout
    (E, C, P, P), so the matmul reproduces the conv exactly."""
    B, C, H, W = x.shape
    P = patch_size
    nh, nw = H // P, W // P
    x = x.reshape(B, C, nh, P, nw, P)
    x = x.transpose(0, 2, 4, 1, 3, 5)            # (B, nh, nw, C, P, P)
    return x.reshape(B * nh * nw, C * P * P)


def _choose_tm(M, per_row_bytes_fn):
    """Largest tm under the VMEM budget, then capped so (a) it never exceeds
    the (8-rounded) M extent and (b) M splits into >= 2 tiles when possible
    (keeps both v7x TensorCores busy on the 'parallel' M axis)."""
    tm = 8
    for cand in _TM_CANDIDATES:
        if per_row_bytes_fn(cand) <= _VMEM_BUDGET:
            tm = cand
            break
    tm = min(tm, _round_up(M, 8))
    if M > 8:
        tm = min(tm, _round_up(pl.cdiv(M, 2), 8))
    return tm


def patch_embed(x, weight, bias, patch_size):
    """x: (B, C, H, W), weight: (E, C, P, P), bias: (E,) -> (B, N, E)."""
    B, C, H, W = x.shape
    assert H == W, "input image must be square (matches the PyTorch assert)"
    assert H % patch_size == 0, "image size must be divisible by patch size"
    P = patch_size
    nh = H // P
    N = nh * nh
    E = weight.shape[0]
    K = C * P * P
    M = B * N
    dtype = x.dtype
    itemsize = jnp.dtype(dtype).itemsize

    patches = _extract_patches(x, P)                          # (M, K)
    w2d = jnp.transpose(weight.reshape(E, K)).astype(dtype)   # (K, E)
    b = bias.astype(dtype)

    # Pad E to a multiple of 128 -> unmasked, lane-dense output stores.
    Ep = _round_up(E, 128)
    if Ep != E:
        w2d = jnp.pad(w2d, ((0, 0), (0, Ep - E)))
        b = jnp.pad(b, (0, Ep - E))
    b2d = b.reshape(1, Ep)

    precision = _dot_precision(dtype)
    compiler_kwargs = dict(vmem_limit_bytes=_VMEM_LIMIT)

    if K <= _MAX_SINGLE_K:
        # --- common PatchEmbed case: one K step, no scratch, 1-D grid over M.
        def needed(tm):
            # double-buffered patches + output tiles, resident weight + bias
            return 2 * (tm * K + K * Ep + Ep + tm * Ep) * itemsize

        tm = _choose_tm(M, needed)
        Mp = _round_up(M, tm)
        if Mp != M:
            patches = jnp.pad(patches, ((0, Mp - M), (0, 0)))

        out = pl.pallas_call(
            functools.partial(_patch_embed_kernel, precision=precision),
            out_shape=jax.ShapeDtypeStruct((Mp, Ep), dtype),
            grid_spec=pltpu.PrefetchScalarGridSpec(
                num_scalar_prefetch=0,
                grid=(Mp // tm,),
                in_specs=[
                    pl.BlockSpec((tm, K), lambda i: (i, 0)),   # patches
                    pl.BlockSpec((K, Ep), lambda i: (0, 0)),   # weight (resident)
                    pl.BlockSpec((1, Ep), lambda i: (0, 0)),   # bias   (resident)
                ],
                out_specs=pl.BlockSpec((tm, Ep), lambda i: (i, 0)),
            ),
            compiler_params=pltpu.CompilerParams(
                dimension_semantics=("parallel",), **compiler_kwargs),
        )(patches, w2d, b2d)
    else:
        # --- generality only: PatchEmbed's K = C*P*P never exceeds 2048.
        tk = 512
        Kp = _round_up(K, tk)
        if Kp != K:
            patches = jnp.pad(patches, ((0, 0), (0, Kp - K)))
            w2d = jnp.pad(w2d, ((0, Kp - K), (0, 0)))

        def needed(tm):
            return (2 * (tm * tk + tk * Ep + Ep + tm * Ep) * itemsize
                    + tm * Ep * 4)                      # + f32 acc scratch

        tm = _choose_tm(M, needed)
        Mp = _round_up(M, tm)
        if Mp != M:
            patches = jnp.pad(patches, ((0, Mp - M), (0, 0)))

        out = pl.pallas_call(
            functools.partial(_patch_embed_kernel_ktiled, precision=precision),
            out_shape=jax.ShapeDtypeStruct((Mp, Ep), dtype),
            grid_spec=pltpu.PrefetchScalarGridSpec(
                num_scalar_prefetch=0,
                grid=(Mp // tm, Kp // tk),
                in_specs=[
                    pl.BlockSpec((tm, tk), lambda i, k: (i, k)),
                    pl.BlockSpec((tk, Ep), lambda i, k: (k, 0)),
                    pl.BlockSpec((1, Ep), lambda i, k: (0, 0)),
                ],
                out_specs=pl.BlockSpec((tm, Ep), lambda i, k: (i, 0)),
                scratch_shapes=[pltpu.VMEM((tm, Ep), jnp.float32)],
            ),
            compiler_params=pltpu.CompilerParams(
                dimension_semantics=("parallel", "arbitrary"),
                **compiler_kwargs),
        )(patches, w2d, b2d)

    return out[:M, :E].reshape(B, N, E)


def _reference(x, weight, bias, patch_size):
    """Direct conv-based reference mirroring the PyTorch module."""
    out = jax.lax.conv_general_dilated(
        x, weight,
        window_strides=(patch_size, patch_size),
        padding="VALID",
        dimension_numbers=("NCHW", "OIHW", "NCHW"),
        precision=jax.lax.Precision.HIGHEST)
    out = out + bias.reshape(1, -1, 1, 1)
    B, E, nh, nw = out.shape
    return out.reshape(B, E, nh * nw).transpose(0, 2, 1)   # (B, N, E)


if __name__ == "__main__":
    key = jax.random.PRNGKey(0)
    # Small PatchEmbed config: batch=2, in_chans=4, img=32, patch=8, embed=256.
    # (M = B*N = 32 so the 1-D grid over M has 2 tiles -> both v7x TCs busy;
    #  E is a multiple of 128 so stores are lane-dense with no padding.)
    B, C, IMG, P, E = 2, 4, 32, 8, 256
    kx, kw, kb = jax.random.split(key, 3)
    x = jax.random.normal(kx, (B, C, IMG, IMG), dtype=jnp.float32)
    fan_in = C * P * P
    weight = jax.random.normal(kw, (E, C, P, P), dtype=jnp.float32) / jnp.sqrt(fan_in)
    bias = 0.01 * jax.random.normal(kb, (E,), dtype=jnp.float32)

    out = patch_embed(x, weight, bias, P)
    out = jax.block_until_ready(out)

    ref = _reference(x, weight, bias, P)
    N = (IMG // P) ** 2
    assert out.shape == (B, N, E)
    assert out.dtype == jnp.float32
    # Both kernel and reference run f32 operands at Precision.HIGHEST.
    err = float(jnp.max(jnp.abs(out - ref)))
    assert jnp.allclose(out, ref, atol=1e-4, rtol=1e-4), \
        f"mismatch vs reference (max abs err {err})"

    print("KERNEL_OK")
</pallas_src>

<mosaic_0001>
module attributes {stable_mosaic.version = 11 : i64} {
  func.func @_patch_embed_kernel(%arg0: i32, %arg1: memref<16x256xf32, #tpu.memory_space<vmem>>, %arg2: memref<256x256xf32, #tpu.memory_space<vmem>>, %arg3: memref<1x256xf32, #tpu.memory_space<vmem>>, %arg4: memref<16x256xf32, #tpu.memory_space<vmem>>) attributes {dimension_semantics = [#tpu.dimension_semantics<parallel>], iteration_bounds = array<i64: 2>, scalar_prefetch = 0 : i64, scratch_operands = 0 : i64, tpu.core_type = #tpu.core_type<tc>, window_params = [{transform_indices = @transform_0, window_bounds = array<i64: 16, 256>}, {pipeline_mode = #tpu.pipeline_mode<synchronous>, transform_indices = @transform_1, window_bounds = array<i64: 256, 256>}, {pipeline_mode = #tpu.pipeline_mode<synchronous>, transform_indices = @transform_2, window_bounds = array<i64: 1, 256>}, {transform_indices = @transform_3, window_bounds = array<i64: 16, 256>}]} {
    %c0 = arith.constant 0 : index
    %c0_0 = arith.constant 0 : index
    %0 = vector.load %arg1[%c0, %c0_0] : memref<16x256xf32, #tpu.memory_space<vmem>>, vector<16x256xf32>
    %c0_1 = arith.constant 0 : index
    %c0_2 = arith.constant 0 : index
    %1 = vector.load %arg2[%c0_1, %c0_2] : memref<256x256xf32, #tpu.memory_space<vmem>>, vector<256x256xf32>
    %cst = arith.constant dense<0.000000e+00> : vector<16x256xf32>
    %2 = tpu.matmul %0, %1, %cst {dimension_numbers = #tpu.dot_dimension_numbers<[1], [0], [0], [1], [0, 0, 1, 1], [], []>, precision = #tpu.contract_precision<fp32>} : vector<16x256xf32>, vector<256x256xf32>, vector<16x256xf32> -> vector<16x256xf32>
    %c0_3 = arith.constant 0 : index
    %c0_4 = arith.constant 0 : index
    %3 = vector.load %arg3[%c0_3, %c0_4] : memref<1x256xf32, #tpu.memory_space<vmem>>, vector<1x256xf32>
    %4 = vector.broadcast %3 : vector<1x256xf32> to vector<16x256xf32>
    %5 = arith.addf %2, %4 : vector<16x256xf32>
    %c0_5 = arith.constant 0 : index
    %c0_6 = arith.constant 0 : index
    %6 = vector.load %arg4[%c0_5, %c0_6] : memref<16x256xf32, #tpu.memory_space<vmem>>, vector<16x256xf32>
    tpu.vector_store %arg4[%c0_5, %c0_6], %5 {strides = array<i32>} : memref<16x256xf32, #tpu.memory_space<vmem>>, vector<16x256xf32>,
    return
  }
  func.func @transform_0(%arg0: i32) -> (i32, i32) {
    %c0_i32 = arith.constant 0 : i32
    %c0_i32_0 = arith.constant 0 : i32
    return %arg0, %c0_i32 : i32, i32
  }
  func.func @transform_1(%arg0: i32) -> (i32, i32) {
    %c0_i32 = arith.constant 0 : i32
    %c0_i32_0 = arith.constant 0 : i32
    %c0_i32_1 = arith.constant 0 : i32
    return %c0_i32, %c0_i32_0 : i32, i32
  }
  func.func @transform_2(%arg0: i32) -> (i32, i32) {
    %c0_i32 = arith.constant 0 : i32
    %c0_i32_0 = arith.constant 0 : i32
    %c0_i32_1 = arith.constant 0 : i32
    return %c0_i32, %c0_i32_0 : i32, i32
  }
  func.func @transform_3(%arg0: i32) -> (i32, i32) {
    %c0_i32 = arith.constant 0 : i32
    %c0_i32_0 = arith.constant 0 : i32
    return %arg0, %c0_i32 : i32, i32
  }
}

</mosaic_0001>

<llo_original>
// kernel: tpu_custom_call.1
$region0: #{tpu_custom_call.1}
  #allocation0 [shape = 'u32[]', space=smem, size = 0x4, offset = 0x4, fixed_abs, tag = 'smem constant byte address 0x4 - core index']
  #allocation1 [shape = 'u32[144,128]{1,0:T(1,128)}', space=vmem, size = 0x12000, scoped, tag = 'internal scratch']
  %s0 = inlined_call_operand.hbm [shape: f32[32,256], index: 0, kind: input, shape index: {}]
  %s1 = inlined_call_operand.hbm [shape: f32[256,256], index: 1, kind: input, shape index: {}]
  %s2 = inlined_call_operand.vmem [shape: f32[1,256], index: 2, kind: input, shape index: {}]
  %s3 = inlined_call_operand.hbm [shape: f32[32,256], index: 3, kind: output, shape index: {}]
  %s4 = sld [smem:[#allocation0]]
  $region53: #{tpu_custom_call.1} parent=0
    _
  %s6 = ssub.s32 1, %s4
  %s7 = scalar_select 0, %s6, %s4
  $region1: #{tpu_custom_call.1} parent=0
    #allocation2 [shape = 'u8[32768]{0}', space=vmem, size = 0x8000, scoped, tag = 'input window, operand 0']
    #allocation3 [shape = 's32[2]{0}', space=sflag, size = 0x8, scoped, tag = 'scoped memory for tpu_custom_call.1']
    #allocation4 [shape = 's32[2]{0}', space=sflag, size = 0x8, scoped, tag = 'scoped memory for tpu_custom_call.1']
    #allocation5 [shape = 'u8[262144]{0}', space=vmem, size = 0x40000, scoped, tag = 'input window, operand 1, single buffered']
    #allocation6 [shape = 's32[1]{0}', space=sflag, size = 0x4, scoped, tag = 'scoped memory for tpu_custom_call.1']
    #allocation7 [shape = 'u8[32768]{0}', space=vmem, size = 0x8000, scoped, tag = 'output window, operand 0']
    %8 = vsyncpa [#allocation3], 0
    %s9 = scalar_lea.sflag [#allocation3], 1
    %10 = vsyncpa %s9, 0
    %11 = vsyncpa [#allocation6], 0
    %12 = vsyncpa [#allocation4], 0
    %s13 = scalar_lea.sflag [#allocation4], 1
    %14 = vsyncpa %s13, 0
    loop: start=0, step=1, limit=4
    $region2: #{tpu_custom_call.1} parent=1 // loop_pre_header
      _
    $region3: #{tpu_custom_call.1} parent=1 // loop_header
      %s16 = sphi 0, %s20
      %p17 = scmp.ge.s32.totalorder %s16, 4
      %s26 = sphi 0, %s28
      %s29 = sphi 0, %s26
      %s30 = sphi 0, %s29
      %s46 = sphi 0, %s30
      %s50 = sphi 0, %s50
      %s52 = sphi 0, %s50
      %s53 = sphi 0, %s52
      %s67 = sphi 0, %s53
      %s71 = sphi 0, %s71
      %s73 = sphi 0, %s71
      %s74 = sphi 0, %s73
      %s88 = sphi 0, %s74
      %s94 = sphi 0, %s96
      %s97 = sphi 0, %s94
      %s98 = sphi 0, %s97
      %s114 = sphi 0, %s98
    $region4: #{tpu_custom_call.1} parent=1 // loop_header_branch
      %19 = sbr.rel (%p17) target = $region8
    $region5: #{tpu_custom_call.1} parent=1 // loop_body
      %s21 = ssub.s32 %s16, 1
      %s22 = ssub.s32 %s16, 2
      %s23 = sadd.s32 %s16, 1
      %s24 = ssub.s32 %s16, %s23
      %p25 = scmp.eq.s32.totalorder %s24, 0
      %s27 = sadd.s32 %s26, 1
      %s28 = scalar_select %p25, %s26, %s27
      %p31 = pneg %p25
      %p32 = scmp.eq.s32.totalorder %s16, 1
      %p33 = por %p31, %p32
      %p34 = scmp.ne.s32.totalorder %s26, %s29
      %p35 = scmp.eq.s32.totalorder %s16, 0
      %p36 = por %p34, %p35
      %p37 = scmp.ne.s32.totalorder %s26, %s29
      %p38 = scmp.eq.s32.totalorder %s21, 1
      %p39 = por %p37, %p38
      %p40 = scmp.ne.s32.totalorder %s29, %s30
      %p41 = scmp.eq.s32.totalorder %s21, 0
      %p42 = por %p40, %p41
      %p43 = scmp.ne.s32.totalorder %s29, %s30
      %p44 = scmp.eq.s32.totalorder %s22, 1
      %p45 = por %p43, %p44
      %p47 = scmp.ne.s32.totalorder %s30, %s46
      %p48 = scmp.eq.s32.totalorder %s22, 0
      %p49 = por %p47, %p48
      %s51 = sadd.s32 %s50, 1
      %p54 = scmp.eq.s32.totalorder %s16, 1
      %p55 = scmp.ne.s32.totalorder %s50, %s52
      %p56 = scmp.eq.s32.totalorder %s16, 0
      %p57 = por %p55, %p56
      %p58 = scmp.ne.s32.totalorder %s50, %s52
      %p59 = scmp.eq.s32.totalorder %s21, 1
      %p60 = por %p58, %p59
      %p61 = scmp.ne.s32.totalorder %s52, %s53
      %p62 = scmp.eq.s32.totalorder %s21, 0
      %p63 = por %p61, %p62
      %p64 = scmp.ne.s32.totalorder %s52, %s53
      %p65 = scmp.eq.s32.totalorder %s22, 1
      %p66 = por %p64, %p65
      %p68 = scmp.ne.s32.totalorder %s53, %s67
      %p69 = scmp.eq.s32.totalorder %s22, 0
      %p70 = por %p68, %p69
      %s72 = sadd.s32 %s71, 1
      %p75 = scmp.eq.s32.totalorder %s16, 1
      %p76 = scmp.ne.s32.totalorder %s71, %s73
      %p77 = scmp.eq.s32.totalorder %s16, 0
      %p78 = por %p76, %p77
      %p79 = scmp.ne.s32.totalorder %s71, %s73
      %p80 = scmp.eq.s32.totalorder %s21, 1
      %p81 = por %p79, %p80
      %p82 = scmp.ne.s32.totalorder %s73, %s74
      %p83 = scmp.eq.s32.totalorder %s21, 0
      %p84 = por %p82, %p83
      %p85 = scmp.ne.s32.totalorder %s73, %s74
      %p86 = scmp.eq.s32.totalorder %s22, 1
      %p87 = por %p85, %p86
      %p89 = scmp.ne.s32.totalorder %s74, %s88
      %p90 = scmp.eq.s32.totalorder %s22, 0
      %p91 = por %p89, %p90
      %s92 = ssub.s32 %s16, %s23
      %p93 = scmp.eq.s32.totalorder %s92, 0
      %s95 = sadd.s32 %s94, 1
      %s96 = scalar_select %p93, %s94, %s95
      %p99 = pneg %p93
      %p100 = scmp.eq.s32.totalorder %s16, 1
      %p101 = por %p99, %p100
      %p102 = scmp.ne.s32.totalorder %s94, %s97
      %p103 = scmp.eq.s32.totalorder %s16, 0
      %p104 = por %p102, %p103
      %p105 = scmp.ne.s32.totalorder %s94, %s97
      %p106 = scmp.eq.s32.totalorder %s21, 1
      %p107 = por %p105, %p106
      %p108 = scmp.ne.s32.totalorder %s97, %s98
      %p109 = scmp.eq.s32.totalorder %s21, 0
      %p110 = por %p108, %p109
      %p111 = scmp.ne.s32.totalorder %s97, %s98
      %p112 = scmp.eq.s32.totalorder %s22, 1
      %p113 = por %p111, %p112
      %p115 = scmp.ne.s32.totalorder %s98, %s114
      %p116 = scmp.eq.s32.totalorder %s22, 0
      %p117 = por %p115, %p116
      %p118 = scmp.le.s32.totalorder 1, %s16
      %p119 = scmp.lt.s32.totalorder %s16, 3
      %p120 = pnand %p118, %p119
      %p121 = pneg %p120
      // Predicated region
      $region9: #{tpu_custom_call.1} parent=5 // pred_check
        _
      $region10: #{tpu_custom_call.1} parent=5 // pred_check_branch
        %123 = sbr.rel (%p120) target = $region12
      $region11: #{tpu_custom_call.1} parent=5 // pred_region
        %s124 = ssub.s32 %s16, 1
        // Predicated region
        $region13: #{tpu_custom_call.1} parent=11 // pred_check
          %p125 = pneg %p63
        $region14: #{tpu_custom_call.1} parent=11 // pred_check_branch
          %127 = sbr.rel (%p125) target = $region16
        $region15: #{tpu_custom_call.1} parent=11 // pred_region
          %s129 = ssub.s32 8192, 8192
          %130 = vsyncadd [#allocation6], %s129
          %s131 = sshll.u32 [#allocation5], 4
          %s132 = int_to_ptr.vmem [resolvable:$true] %s131
          %137 = dma.hbm_to_vmem [thread:$0]  %s1, 8192, %s132, [#allocation6], 256, 256, 16
        $region16: #{tpu_custom_call.1} parent=11 // pred_fallthru
          _
        // Predicated region
        $region17: #{tpu_custom_call.1} parent=11 // pred_check
          %p138 = pneg %p84
        $region18: #{tpu_custom_call.1} parent=11 // pred_check_branch
          %140 = sbr.rel (%p138) target = $region20
        $region19: #{tpu_custom_call.1} parent=11 // pred_region
          _
        $region20: #{tpu_custom_call.1} parent=11 // pred_fallthru
          _
      $region12: #{tpu_custom_call.1} parent=5 // pred_fallthru
        _
      %p141 = scmp.lt.s32.totalorder %s16, 2
      // Predicated region
      $region21: #{tpu_custom_call.1} parent=5 // pred_check
        %p142 = pneg %p141
      $region22: #{tpu_custom_call.1} parent=5 // pred_check_branch
        %144 = sbr.rel (%p142) target = $region24
      $region23: #{tpu_custom_call.1} parent=5 // pred_region
        // Predicated region
        $region25: #{tpu_custom_call.1} parent=23 // pred_check
          %p145 = pneg %p36
        $region26: #{tpu_custom_call.1} parent=23 // pred_check_branch
          %147 = sbr.rel (%p145) target = $region28
        $region27: #{tpu_custom_call.1} parent=23 // pred_region
          %s148 = sand.u32 %s26, 1
          %s149 = scalar_lea.sflag [#allocation3], %s148
          %s150 = sand.u32 %s26, 1
          %s151 = smul.addr %s150, 32
          %s152 = scalar_lea.vmem [#allocation2], %s151
          %s153 = smul.u32 2, %s16
          %s155 = ssub.s32 512, 512
          %156 = vsyncadd %s149, %s155
          %s157 = smul.addr %s153, 2
          %s158 = smul.addr %s157, 128
          %s159 = scalar_lea.hbm %s0, %s158
          %s160 = sshll.u32 %s152, 4
          %s161 = int_to_ptr.vmem [resolvable:$true] %s160
          %166 = dma.hbm_to_vmem [thread:$0]  %s159, 512, %s161, %s149, 256, 256, 16
        $region28: #{tpu_custom_call.1} parent=23 // pred_fallthru
          _
      $region24: #{tpu_custom_call.1} parent=5 // pred_fallthru
        _
      %p167 = scmp.le.s32.totalorder 1, %s16
      %p168 = scmp.lt.s32.totalorder %s16, 3
      %p169 = pnand %p167, %p168
      %p170 = pneg %p169
      // Predicated region
      $region29: #{tpu_custom_call.1} parent=5 // pred_check
        _
      $region30: #{tpu_custom_call.1} parent=5 // pred_check_branch
        %172 = sbr.rel (%p169) target = $region32
      $region31: #{tpu_custom_call.1} parent=5 // pred_region
        %s173 = ssub.s32 %s16, 1
        %s174 = sand.u32 %s29, 1
        %s175 = scalar_lea.sflag [#allocation3], %s174
        %s176 = sand.u32 %s29, 1
        %s177 = smul.addr %s176, 32
        %s178 = scalar_lea.vmem [#allocation2], %s177
        // Predicated region
        $region33: #{tpu_custom_call.1} parent=31 // pred_check
          %p179 = pneg %p42
        $region34: #{tpu_custom_call.1} parent=31 // pred_check_branch
          %181 = sbr.rel (%p179) target = $region36
        $region35: #{tpu_custom_call.1} parent=31 // pred_region
          %182 = dma.done %s175, 512
        $region36: #{tpu_custom_call.1} parent=31 // pred_fallthru
          _
        // Predicated region
        $region37: #{tpu_custom_call.1} parent=31 // pred_check
          %p183 = pneg %p63
        $region38: #{tpu_custom_call.1} parent=31 // pred_check_branch
          %185 = sbr.rel (%p183) target = $region40
        $region39: #{tpu_custom_call.1} parent=31 // pred_region
          %186 = dma.done [#allocation6], 8192
        $region40: #{tpu_custom_call.1} parent=31 // pred_fallthru
          _
        %s187 = sand.u32 %s29, 1
        %s188 = scalar_lea.sflag [#allocation3], %s187
        %s189 = sand.u32 %s29, 1
        %s190 = smul.addr %s189, 32
        %s191 = scalar_lea.vmem [#allocation2], %s190
        %p192 = pneg %p42
        %p193 = pneg %p39
        %p194 = pneg %p63
        %p195 = pneg %p60
        %p196 = pneg %p84
        %p197 = pneg %p81
        %p198 = pneg %p110
        %p199 = pneg %p107
        %s200 = sand.u32 %s97, 1
        %s201 = scalar_lea.sflag [#allocation4], %s200
        %s202 = sand.u32 %s97, 1
        %s203 = smul.addr %s202, 32
        %s204 = scalar_lea.vmem [#allocation7], %s203
        %s205 = smul.u32 2, %s21
        %s206 = smul.u32 2, %s21
        %v207 = vld [vmem:[%s178] sm:$0xff]
        %v208 = vld [vmem:[%s178 + $0x8] sm:$0xff]
        %v209 = vld [vmem:[%s178 + $0x10] sm:$0xff]
        %v210 = vld [vmem:[%s178 + $0x18] sm:$0xff]
        %v211 = vld [vmem:[#allocation5] sm:$0xff]
        %v212 = vld [vmem:[#allocation5 + $0x8] sm:$0xff]
        %v213 = vld [vmem:[#allocation5 + $0x10] sm:$0xff]
        %v214 = vld [vmem:[#allocation5 + $0x18] sm:$0xff]
        %v215 = vld [vmem:[#allocation5 + $0x20] sm:$0xff]
        %v216 = vld [vmem:[#allocation5 + $0x28] sm:$0xff]
        %v217 = vld [vmem:[#allocation5 + $0x30] sm:$0xff]
        %v218 = vld [vmem:[#allocation5 + $0x38] sm:$0xff]
        %v219 = vld [vmem:[#allocation5 + $0x40] sm:$0xff]
        %v220 = vld [vmem:[#allocation5 + $0x48] sm:$0xff]
        %v221 = vld [vmem:[#allocation5 + $0x50] sm:$0xff]
        %v222 = vld [vmem:[#allocation5 + $0x58] sm:$0xff]
        %v223 = vld [vmem:[#allocation5 + $0x60] sm:$0xff]
        %v224 = vld [vmem:[#allocation5 + $0x68] sm:$0xff]
        %v225 = vld [vmem:[#allocation5 + $0x70] sm:$0xff]
        %v226 = vld [vmem:[#allocation5 + $0x78] sm:$0xff]
        %v227 = vld [vmem:[#allocation5 + $0x80] sm:$0xff]
        %v228 = vld [vmem:[#allocation5 + $0x88] sm:$0xff]
        %v229 = vld [vmem:[#allocation5 + $0x90] sm:$0xff]
        %v230 = vld [vmem:[#allocation5 + $0x98] sm:$0xff]
        %v231 = vld [vmem:[#allocation5 + $0xa0] sm:$0xff]
        %v232 = vld [vmem:[#allocation5 + $0xa8] sm:$0xff]
        %v233 = vld [vmem:[#allocation5 + $0xb0] sm:$0xff]
        %v234 = vld [vmem:[#allocation5 + $0xb8] sm:$0xff]
        %v235 = vld [vmem:[#allocation5 + $0xc0] sm:$0xff]
        %v236 = vld [vmem:[#allocation5 + $0xc8] sm:$0xff]
        %v237 = vld [vmem:[#allocation5 + $0xd0] sm:$0xff]
        %v238 = vld [vmem:[#allocation5 + $0xd8] sm:$0xff]
        %v239 = vld [vmem:[#allocation5 + $0xe0] sm:$0xff]
        %v240 = vld [vmem:[#allocation5 + $0xe8] sm:$0xff]
        %v241 = vld [vmem:[#allocation5 + $0xf0] sm:$0xff]
        %v242 = vld [vmem:[#allocation5 + $0xf8] sm:$0xff]
        %v243 = vld [vmem:[#allocation5 + $0x100] sm:$0xff]
        %v244 = vld [vmem:[#allocation5 + $0x108] sm:$0xff]
        %v245 = vld [vmem:[#allocation5 + $0x110] sm:$0xff]
        %v246 = vld [vmem:[#allocation5 + $0x118] sm:$0xff]
        %v247 = vld [vmem:[#allocation5 + $0x120] sm:$0xff]
        %v248 = vld [vmem:[#allocation5 + $0x128] sm:$0xff]
        %v249 = vld [vmem:[#allocation5 + $0x130] sm:$0xff]
        %v250 = vld [vmem:[#allocation5 + $0x138] sm:$0xff]
        %v251 = vld [vmem:[#allocation5 + $0x140] sm:$0xff]
        %v252 = vld [vmem:[#allocation5 + $0x148] sm:$0xff]
        %v253 = vld [vmem:[#allocation5 + $0x150] sm:$0xff]
        %v254 = vld [vmem:[#allocation5 + $0x158] sm:$0xff]
        %v255 = vld [vmem:[#allocation5 + $0x160] sm:$0xff]
        %v256 = vld [vmem:[#allocation5 + $0x168] sm:$0xff]
        %v257 = vld [vmem:[#allocation5 + $0x170] sm:$0xff]
        %v258 = vld [vmem:[#allocation5 + $0x178] sm:$0xff]
        %v259 = vld [vmem:[#allocation5 + $0x180] sm:$0xff]
        %v260 = vld [vmem:[#allocation5 + $0x188] sm:$0xff]
        %v261 = vld [vmem:[#allocation5 + $0x190] sm:$0xff]
        %v262 = vld [vmem:[#allocation5 + $0x198] sm:$0xff]
        %v263 = vld [vmem:[#allocation5 + $0x1a0] sm:$0xff]
        %v264 = vld [vmem:[#allocation5 + $0x1a8] sm:$0xff]
        %v265 = vld [vmem:[#allocation5 + $0x1b0] sm:$0xff]
        %v266 = vld [vmem:[#allocation5 + $0x1b8] sm:$0xff]
        %v267 = vld [vmem:[#allocation5 + $0x1c0] sm:$0xff]
        %v268 = vld [vmem:[#allocation5 + $0x1c8] sm:$0xff]
        %v269 = vld [vmem:[#allocation5 + $0x1d0] sm:$0xff]
        %v270 = vld [vmem:[#allocation5 + $0x1d8] sm:$0xff]
        %v271 = vld [vmem:[#allocation5 + $0x1e0] sm:$0xff]
        %v272 = vld [vmem:[#allocation5 + $0x1e8] sm:$0xff]
        %v273 = vld [vmem:[#allocation5 + $0x1f0] sm:$0xff]
        %v274 = vld [vmem:[#allocation5 + $0x1f8] sm:$0xff]
        %v275 = vld [vmem:[%s2] sm:$0x3]
        %v277 = vlaneseq
        %v278 = vshrl.u32 %v277, 7
        %v279 = vsub.s32 0, %v278
        %v280 = vrot.slane %v275, %v279
        %v281 = vlaneseq
        %v282 = vshrl.u32 %v281, 7
        %v283 = vsub.s32 1, %v282
        %v284 = vrot.slane %v275, %v283
        %v287 = vand.u32 %v242, 4294901760
        %288 = vmatprep.subr.mxu0 %v287
        %v289 = vand.u32 %v241, 4294901760
        %290 = vmatpush1.msra.mxu0 %v289
        %v291 = vand.u32 %v240, 4294901760
        %292 = vmatprep.subr.mxu0 %v291
        %v293 = vand.u32 %v239, 4294901760
        %294 = vmatpush1.msra.mxu0 %v293
        %v295 = vand.u32 %v238, 4294901760
        %296 = vmatprep.subr.mxu0 %v295
        %v297 = vand.u32 %v237, 4294901760
        %298 = vmatpush1.msra.mxu0 %v297
        %v299 = vand.u32 %v236, 4294901760
        %300 = vmatprep.subr.mxu0 %v299
        %v301 = vand.u32 %v235, 4294901760
        %302 = vmatpush1.msra.mxu0 %v301
        %v303 = vand.u32 %v234, 4294901760
        %304 = vmatprep.subr.mxu0 %v303
        %v305 = vand.u32 %v233, 4294901760
        %306 = vmatpush1.msra.mxu0 %v305
        %v307 = vand.u32 %v232, 4294901760
        %308 = vmatprep.subr.mxu0 %v307
        %v309 = vand.u32 %v231, 4294901760
        %310 = vmatpush1.msra.mxu0 %v309
        %v311 = vand.u32 %v230, 4294901760
        %312 = vmatprep.subr.mxu0 %v311
        %v313 = vand.u32 %v229, 4294901760
        %314 = vmatpush1.msra.mxu0 %v313
        %v315 = vand.u32 %v228, 4294901760
        %316 = vmatprep.subr.mxu0 %v315
        %v317 = vand.u32 %v227, 4294901760
        %318 = vmatpush1.msra.mxu0 %v317
        %v319 = vand.u32 %v226, 4294901760
        %320 = vmatprep.subr.mxu0 %v319
        %v321 = vand.u32 %v225, 4294901760
        %322 = vmatpush1.msra.mxu0 %v321
        %v323 = vand.u32 %v224, 4294901760
        %324 = vmatprep.subr.mxu0 %v323
        %v325 = vand.u32 %v223, 4294901760
        %326 = vmatpush1.msra.mxu0 %v325
        %v327 = vand.u32 %v222, 4294901760
        %328 = vmatprep.subr.mxu0 %v327
        %v329 = vand.u32 %v221, 4294901760
        %330 = vmatpush1.msra.mxu0 %v329
        %v331 = vand.u32 %v220, 4294901760
        %332 = vmatprep.subr.mxu0 %v331
        %v333 = vand.u32 %v219, 4294901760
        %334 = vmatpush1.msra.mxu0 %v333
        %v335 = vand.u32 %v218, 4294901760
        %336 = vmatprep.subr.mxu0 %v335
        %v337 = vand.u32 %v217, 4294901760
        %338 = vmatpush1.msra.mxu0 %v337
        %v339 = vand.u32 %v216, 4294901760
        %340 = vmatprep.subr.mxu0 %v339
        %v341 = vand.u32 %v215, 4294901760
        %342 = vmatpush1.msra.mxu0 %v341
        %v343 = vand.u32 %v214, 4294901760
        %344 = vmatprep.subr.mxu0 %v343
        %v345 = vand.u32 %v213, 4294901760
        %346 = vmatpush1.msra.mxu0 %v345
        %v347 = vand.u32 %v212, 4294901760
        %348 = vmatprep.subr.mxu0 %v347
        %v349 = vand.u32 %v211, 4294901760
        %350 = vmatpush1.msra.mxu0 %v349
        %v351 = vand.u32 %v274, 4294901760
        %352 = vmatprep.subr.mxu0 %v351
        %v353 = vand.u32 %v273, 4294901760
        %354 = vmatpush2.msra.mxu0 %v353
        %v355 = vand.u32 %v272, 4294901760
        %356 = vmatprep.subr.mxu0 %v355
        %v357 = vand.u32 %v271, 4294901760
        %358 = vmatpush2.msra.mxu0 %v357
        %v359 = vand.u32 %v270, 4294901760
        %360 = vmatprep.subr.mxu0 %v359
        %v361 = vand.u32 %v269, 4294901760
        %362 = vmatpush2.msra.mxu0 %v361
        %v363 = vand.u32 %v268, 4294901760
        %364 = vmatprep.subr.mxu0 %v363
        %v365 = vand.u32 %v267, 4294901760
        %366 = vmatpush2.msra.mxu0 %v365
        %v367 = vand.u32 %v266, 4294901760
        %368 = vmatprep.subr.mxu0 %v367
        %v369 = vand.u32 %v265, 4294901760
        %370 = vmatpush2.msra.mxu0 %v369
        %v371 = vand.u32 %v264, 4294901760
        %372 = vmatprep.subr.mxu0 %v371
        %v373 = vand.u32 %v263, 4294901760
        %374 = vmatpush2.msra.mxu0 %v373
        %v375 = vand.u32 %v262, 4294901760
        %376 = vmatprep.subr.mxu0 %v375
        %v377 = vand.u32 %v261, 4294901760
        %378 = vmatpush2.msra.mxu0 %v377
        %v379 = vand.u32 %v260, 4294901760
        %380 = vmatprep.subr.mxu0 %v379
        %v381 = vand.u32 %v259, 4294901760
        %382 = vmatpush2.msra.mxu0 %v381
        %v383 = vand.u32 %v258, 4294901760
        %384 = vmatprep.subr.mxu0 %v383
        %v385 = vand.u32 %v257, 4294901760
        %386 = vmatpush2.msra.mxu0 %v385
        %v387 = vand.u32 %v256, 4294901760
        %388 = vmatprep.subr.mxu0 %v387
        %v389 = vand.u32 %v255, 4294901760
        %390 = vmatpush2.msra.mxu0 %v389
        %v391 = vand.u32 %v254, 4294901760
        %392 = vmatprep.subr.mxu0 %v391
        %v393 = vand.u32 %v253, 4294901760
        %394 = vmatpush2.msra.mxu0 %v393
        %v395 = vand.u32 %v252, 4294901760
        %396 = vmatprep.subr.mxu0 %v395
        %v397 = vand.u32 %v251, 4294901760
        %398 = vmatpush2.msra.mxu0 %v397
        %v399 = vand.u32 %v250, 4294901760
        %400 = vmatprep.subr.mxu0 %v399
        %v401 = vand.u32 %v249, 4294901760
        %402 = vmatpush2.msra.mxu0 %v401
        %v403 = vand.u32 %v248, 4294901760
        %404 = vmatprep.subr.mxu0 %v403
        %v405 = vand.u32 %v247, 4294901760
        %406 = vmatpush2.msra.mxu0 %v405
        %v407 = vand.u32 %v246, 4294901760
        %408 = vmatprep.subr.mxu0 %v407
        %v409 = vand.u32 %v245, 4294901760
        %410 = vmatpush2.msra.mxu0 %v409
        %v411 = vand.u32 %v244, 4294901760
        %412 = vmatprep.subr.mxu0 %v411
        %v413 = vand.u32 %v243, 4294901760
        %414 = vmatpush2.msra.mxu0 %v413
        %v415 = vand.u32 %v208, 4294901760
        %v416 = vsub.f32 %v208, %v415
        %v417 = vand.u32 %v416, 4294901760
        %v418 = vsub.f32 %v416, %v417
        %v419 = vand.u32 %v418, 4294901760
        %420 = vmatprep.mubr.f32.mxu0 %v419
        %v421 = vand.u32 %v207, 4294901760
        %v422 = vsub.f32 %v207, %v421
        %v423 = vand.u32 %v422, 4294901760
        %v424 = vsub.f32 %v422, %v423
        %v425 = vand.u32 %v424, 4294901760
        %426 = vmatmul.mubr.f32.gmra.mxu0 %v425
        %v427 = vpop.f32.mrf.mxu0
        %v428 = vadd.f32 %v280, %v427
        %v429 = vpop.f32.mrf.mxu0
        %v430 = vadd.f32 %v284, %v429
        %v431 = vand.u32 %v210, 4294901760
        %v432 = vsub.f32 %v210, %v431
        %v433 = vand.u32 %v432, 4294901760
        %v434 = vsub.f32 %v432, %v433
        %v435 = vand.u32 %v434, 4294901760
        %436 = vmatprep.mubr.f32.mxu0 %v435
        %v437 = vand.u32 %v209, 4294901760
        %v438 = vsub.f32 %v209, %v437
        %v439 = vand.u32 %v438, 4294901760
        %v440 = vsub.f32 %v438, %v439
        %v441 = vand.u32 %v440, 4294901760
        %442 = vmatmul.mubr.f32.gmra.mxu0 %v441
        %v443 = vpop.f32.mrf.mxu0
        %v444 = vadd.f32 %v280, %v443
        %v445 = vpop.f32.mrf.mxu0
        %v446 = vadd.f32 %v284, %v445
        %447 = vdwg.mxu0
        %v448 = vand.u32 %v242, 4294901760
        %v449 = vsub.f32 %v242, %v448
        %v450 = vand.u32 %v449, 4294901760
        %v451 = vsub.f32 %v449, %v450
        %v452 = vand.u32 %v451, 4294901760
        %453 = vmatprep.subr.mxu0 %v452
        %v454 = vand.u32 %v241, 4294901760
        %v455 = vsub.f32 %v241, %v454
        %v456 = vand.u32 %v455, 4294901760
        %v457 = vsub.f32 %v455, %v456
        %v458 = vand.u32 %v457, 4294901760
        %459 = vmatpush1.msra.mxu0 %v458
        %v460 = vand.u32 %v240, 4294901760
        %v461 = vsub.f32 %v240, %v460
        %v462 = vand.u32 %v461, 4294901760
        %v463 = vsub.f32 %v461, %v462
        %v464 = vand.u32 %v463, 4294901760
        %465 = vmatprep.subr.mxu0 %v464
        %v466 = vand.u32 %v239, 4294901760
        %v467 = vsub.f32 %v239, %v466
        %v468 = vand.u32 %v467, 4294901760
        %v469 = vsub.f32 %v467, %v468
        %v470 = vand.u32 %v469, 4294901760
        %471 = vmatpush1.msra.mxu0 %v470
        %v472 = vand.u32 %v238, 4294901760
        %v473 = vsub.f32 %v238, %v472
        %v474 = vand.u32 %v473, 4294901760
        %v475 = vsub.f32 %v473, %v474
        %v476 = vand.u32 %v475, 4294901760
        %477 = vmatprep.subr.mxu0 %v476
        %v478 = vand.u32 %v237, 4294901760
        %v479 = vsub.f32 %v237, %v478
        %v480 = vand.u32 %v479, 4294901760
        %v481 = vsub.f32 %v479, %v480
        %v482 = vand.u32 %v481, 4294901760
        %483 = vmatpush1.msra.mxu0 %v482
        %v484 = vand.u32 %v236, 4294901760
        %v485 = vsub.f32 %v236, %v484
        %v486 = vand.u32 %v485, 4294901760
        %v487 = vsub.f32 %v485, %v486
        %v488 = vand.u32 %v487, 4294901760
        %489 = vmatprep.subr.mxu0 %v488
        %v490 = vand.u32 %v235, 4294901760
        %v491 = vsub.f32 %v235, %v490
        %v492 = vand.u32 %v491, 4294901760
        %v493 = vsub.f32 %v491, %v492
        %v494 = vand.u32 %v493, 4294901760
        %495 = vmatpush1.msra.mxu0 %v494
        %v496 = vand.u32 %v234, 4294901760
        %v497 = vsub.f32 %v234, %v496
        %v498 = vand.u32 %v497, 4294901760
        %v499 = vsub.f32 %v497, %v498
        %v500 = vand.u32 %v499, 4294901760
        %501 = vmatprep.subr.mxu0 %v500
        %v502 = vand.u32 %v233, 4294901760
        %v503 = vsub.f32 %v233, %v502
        %v504 = vand.u32 %v503, 4294901760
        %v505 = vsub.f32 %v503, %v504
        %v506 = vand.u32 %v505, 4294901760
        %507 = vmatpush1.msra.mxu0 %v506
        %v508 = vand.u32 %v232, 4294901760
        %v509 = vsub.f32 %v232, %v508
        %v510 = vand.u32 %v509, 4294901760
        %v511 = vsub.f32 %v509, %v510
        %v512 = vand.u32 %v511, 4294901760
        %513 = vmatprep.subr.mxu0 %v512
        %v514 = vand.u32 %v231, 4294901760
        %v515 = vsub.f32 %v231, %v514
        %v516 = vand.u32 %v515, 4294901760
        %v517 = vsub.f32 %v515, %v516
        %v518 = vand.u32 %v517, 4294901760
        %519 = vmatpush1.msra.mxu0 %v518
        %v520 = vand.u32 %v230, 4294901760
        %v521 = vsub.f32 %v230, %v520
        %v522 = vand.u32 %v521, 4294901760
        %v523 = vsub.f32 %v521, %v522
        %v524 = vand.u32 %v523, 4294901760
        %525 = vmatprep.subr.mxu0 %v524
        %v526 = vand.u32 %v229, 4294901760
        %v527 = vsub.f32 %v229, %v526
        %v528 = vand.u32 %v527, 4294901760
        %v529 = vsub.f32 %v527, %v528
        %v530 = vand.u32 %v529, 4294901760
        %531 = vmatpush1.msra.mxu0 %v530
        %v532 = vand.u32 %v228, 4294901760
        %v533 = vsub.f32 %v228, %v532
        %v534 = vand.u32 %v533, 4294901760
        %v535 = vsub.f32 %v533, %v534
        %v536 = vand.u32 %v535, 4294901760
        %537 = vmatprep.subr.mxu0 %v536
        %v538 = vand.u32 %v227, 4294901760
        %v539 = vsub.f32 %v227, %v538
        %v540 = vand.u32 %v539, 4294901760
        %v541 = vsub.f32 %v539, %v540
        %v542 = vand.u32 %v541, 4294901760
        %543 = vmatpush1.msra.mxu0 %v542
        %v544 = vand.u32 %v226, 4294901760
        %v545 = vsub.f32 %v226, %v544
        %v546 = vand.u32 %v545, 4294901760
        %v547 = vsub.f32 %v545, %v546
        %v548 = vand.u32 %v547, 4294901760
        %549 = vmatprep.subr.mxu0 %v548
        %v550 = vand.u32 %v225, 4294901760
        %v551 = vsub.f32 %v225, %v550
        %v552 = vand.u32 %v551, 4294901760
        %v553 = vsub.f32 %v551, %v552
        %v554 = vand.u32 %v553, 4294901760
        %555 = vmatpush1.msra.mxu0 %v554
        %v556 = vand.u32 %v224, 4294901760
        %v557 = vsub.f32 %v224, %v556
        %v558 = vand.u32 %v557, 4294901760
        %v559 = vsub.f32 %v557, %v558
        %v560 = vand.u32 %v559, 4294901760
        %561 = vmatprep.subr.mxu0 %v560
        %v562 = vand.u32 %v223, 4294901760
        %v563 = vsub.f32 %v223, %v562
        %v564 = vand.u32 %v563, 4294901760
        %v565 = vsub.f32 %v563, %v564
        %v566 = vand.u32 %v565, 4294901760
        %567 = vmatpush1.msra.mxu0 %v566
        %v568 = vand.u32 %v222, 4294901760
        %v569 = vsub.f32 %v222, %v568
        %v570 = vand.u32 %v569, 4294901760
        %v571 = vsub.f32 %v569, %v570
        %v572 = vand.u32 %v571, 4294901760
        %573 = vmatprep.subr.mxu0 %v572
        %v574 = vand.u32 %v221, 4294901760
        %v575 = vsub.f32 %v221, %v574
        %v576 = vand.u32 %v575, 4294901760
        %v577 = vsub.f32 %v575, %v576
        %v578 = vand.u32 %v577, 4294901760
        %579 = vmatpush1.msra.mxu0 %v578
        %v580 = vand.u32 %v220, 4294901760
        %v581 = vsub.f32 %v220, %v580
        %v582 = vand.u32 %v581, 4294901760
        %v583 = vsub.f32 %v581, %v582
        %v584 = vand.u32 %v583, 4294901760
        %585 = vmatprep.subr.mxu0 %v584
        %v586 = vand.u32 %v219, 4294901760
        %v587 = vsub.f32 %v219, %v586
        %v588 = vand.u32 %v587, 4294901760
        %v589 = vsub.f32 %v587, %v588
        %v590 = vand.u32 %v589, 4294901760
        %591 = vmatpush1.msra.mxu0 %v590
        %v592 = vand.u32 %v218, 4294901760
        %v593 = vsub.f32 %v218, %v592
        %v594 = vand.u32 %v593, 4294901760
        %v595 = vsub.f32 %v593, %v594
        %v596 = vand.u32 %v595, 4294901760
        %597 = vmatprep.subr.mxu0 %v596
        %v598 = vand.u32 %v217, 4294901760
        %v599 = vsub.f32 %v217, %v598
        %v600 = vand.u32 %v599, 4294901760
        %v601 = vsub.f32 %v599, %v600
        %v602 = vand.u32 %v601, 4294901760
        %603 = vmatpush1.msra.mxu0 %v602
        %v604 = vand.u32 %v216, 4294901760
        %v605 = vsub.f32 %v216, %v604
        %v606 = vand.u32 %v605, 4294901760
        %v607 = vsub.f32 %v605, %v606
        %v608 = vand.u32 %v607, 4294901760
        %609 = vmatprep.subr.mxu0 %v608
        %v610 = vand.u32 %v215, 4294901760
        %v611 = vsub.f32 %v215, %v610
        %v612 = vand.u32 %v611, 4294901760
        %v613 = vsub.f32 %v611, %v612
        %v614 = vand.u32 %v613, 4294901760
        %615 = vmatpush1.msra.mxu0 %v614
        %v616 = vand.u32 %v214, 4294901760
        %v617 = vsub.f32 %v214, %v616
        %v618 = vand.u32 %v617, 4294901760
        %v619 = vsub.f32 %v617, %v618
        %v620 = vand.u32 %v619, 4294901760
        %621 = vmatprep.subr.mxu0 %v620
        %v622 = vand.u32 %v213, 4294901760
        %v623 = vsub.f32 %v213, %v622
        %v624 = vand.u32 %v623, 4294901760
        %v625 = vsub.f32 %v623, %v624
        %v626 = vand.u32 %v625, 4294901760
        %627 = vmatpush1.msra.mxu0 %v626
        %v628 = vand.u32 %v212, 4294901760
        %v629 = vsub.f32 %v212, %v628
        %v630 = vand.u32 %v629, 4294901760
        %v631 = vsub.f32 %v629, %v630
        %v632 = vand.u32 %v631, 4294901760
        %633 = vmatprep.subr.mxu0 %v632
        %v634 = vand.u32 %v211, 4294901760
        %v635 = vsub.f32 %v211, %v634
        %v636 = vand.u32 %v635, 4294901760
        %v637 = vsub.f32 %v635, %v636
        %v638 = vand.u32 %v637, 4294901760
        %639 = vmatpush1.msra.mxu0 %v638
        %v640 = vand.u32 %v274, 4294901760
        %v641 = vsub.f32 %v274, %v640
        %v642 = vand.u32 %v641, 4294901760
        %v643 = vsub.f32 %v641, %v642
        %v644 = vand.u32 %v643, 4294901760
        %645 = vmatprep.subr.mxu0 %v644
        %v646 = vand.u32 %v273, 4294901760
        %v647 = vsub.f32 %v273, %v646
        %v648 = vand.u32 %v647, 4294901760
        %v649 = vsub.f32 %v647, %v648
        %v650 = vand.u32 %v649, 4294901760
        %651 = vmatpush2.msra.mxu0 %v650
        %v652 = vand.u32 %v272, 4294901760
        %v653 = vsub.f32 %v272, %v652
        %v654 = vand.u32 %v653, 4294901760
        %v655 = vsub.f32 %v653, %v654
        %v656 = vand.u32 %v655, 4294901760
        %657 = vmatprep.subr.mxu0 %v656
        %v658 = vand.u32 %v271, 4294901760
        %v659 = vsub.f32 %v271, %v658
        %v660 = vand.u32 %v659, 4294901760
        %v661 = vsub.f32 %v659, %v660
        %v662 = vand.u32 %v661, 4294901760
        %663 = vmatpush2.msra.mxu0 %v662
        %v664 = vand.u32 %v270, 4294901760
        %v665 = vsub.f32 %v270, %v664
        %v666 = vand.u32 %v665, 4294901760
        %v667 = vsub.f32 %v665, %v666
        %v668 = vand.u32 %v667, 4294901760
        %669 = vmatprep.subr.mxu0 %v668
        %v670 = vand.u32 %v269, 4294901760
        %v671 = vsub.f32 %v269, %v670
        %v672 = vand.u32 %v671, 4294901760
        %v673 = vsub.f32 %v671, %v672
        %v674 = vand.u32 %v673, 4294901760
        %675 = vmatpush2.msra.mxu0 %v674
        %v676 = vand.u32 %v268, 4294901760
        %v677 = vsub.f32 %v268, %v676
        %v678 = vand.u32 %v677, 4294901760
        %v679 = vsub.f32 %v677, %v678
        %v680 = vand.u32 %v679, 4294901760
        %681 = vmatprep.subr.mxu0 %v680
        %v682 = vand.u32 %v267, 4294901760
        %v683 = vsub.f32 %v267, %v682
        %v684 = vand.u32 %v683, 4294901760
        %v685 = vsub.f32 %v683, %v684
        %v686 = vand.u32 %v685, 4294901760
        %687 = vmatpush2.msra.mxu0 %v686
        %v688 = vand.u32 %v266, 4294901760
        %v689 = vsub.f32 %v266, %v688
        %v690 = vand.u32 %v689, 4294901760
        %v691 = vsub.f32 %v689, %v690
        %v692 = vand.u32 %v691, 4294901760
        %693 = vmatprep.subr.mxu0 %v692
        %v694 = vand.u32 %v265, 4294901760
        %v695 = vsub.f32 %v265, %v694
        %v696 = vand.u32 %v695, 4294901760
        %v697 = vsub.f32 %v695, %v696
        %v698 = vand.u32 %v697, 4294901760
        %699 = vmatpush2.msra.mxu0 %v698
        %v700 = vand.u32 %v264, 4294901760
        %v701 = vsub.f32 %v264, %v700
        %v702 = vand.u32 %v701, 4294901760
        %v703 = vsub.f32 %v701, %v702
        %v704 = vand.u32 %v703, 4294901760
        %705 = vmatprep.subr.mxu0 %v704
        %v706 = vand.u32 %v263, 4294901760
        %v707 = vsub.f32 %v263, %v706
        %v708 = vand.u32 %v707, 4294901760
        %v709 = vsub.f32 %v707, %v708
        %v710 = vand.u32 %v709, 4294901760
        %711 = vmatpush2.msra.mxu0 %v710
        %v712 = vand.u32 %v262, 4294901760
        %v713 = vsub.f32 %v262, %v712
        %v714 = vand.u32 %v713, 4294901760
        %v715 = vsub.f32 %v713, %v714
        %v716 = vand.u32 %v715, 4294901760
        %717 = vmatprep.subr.mxu0 %v716
        %v718 = vand.u32 %v261, 4294901760
        %v719 = vsub.f32 %v261, %v718
        %v720 = vand.u32 %v719, 4294901760
        %v721 = vsub.f32 %v719, %v720
        %v722 = vand.u32 %v721, 4294901760
        %723 = vmatpush2.msra.mxu0 %v722
        %v724 = vand.u32 %v260, 4294901760
        %v725 = vsub.f32 %v260, %v724
        %v726 = vand.u32 %v725, 4294901760
        %v727 = vsub.f32 %v725, %v726
        %v728 = vand.u32 %v727, 4294901760
        %729 = vmatprep.subr.mxu0 %v728
        %v730 = vand.u32 %v259, 4294901760
        %v731 = vsub.f32 %v259, %v730
        %v732 = vand.u32 %v731, 4294901760
        %v733 = vsub.f32 %v731, %v732
        %v734 = vand.u32 %v733, 4294901760
        %735 = vmatpush2.msra.mxu0 %v734
        %v736 = vand.u32 %v258, 4294901760
        %v737 = vsub.f32 %v258, %v736
        %v738 = vand.u32 %v737, 4294901760
        %v739 = vsub.f32 %v737, %v738
        %v740 = vand.u32 %v739, 4294901760
        %741 = vmatprep.subr.mxu0 %v740
        %v742 = vand.u32 %v257, 4294901760
        %v743 = vsub.f32 %v257, %v742
        %v744 = vand.u32 %v743, 4294901760
        %v745 = vsub.f32 %v743, %v744
        %v746 = vand.u32 %v745, 4294901760
        %747 = vmatpush2.msra.mxu0 %v746
        %v748 = vand.u32 %v256, 4294901760
        %v749 = vsub.f32 %v256, %v748
        %v750 = vand.u32 %v749, 4294901760
        %v751 = vsub.f32 %v749, %v750
        %v752 = vand.u32 %v751, 4294901760
        %753 = vmatprep.subr.mxu0 %v752
        %v754 = vand.u32 %v255, 4294901760
        %v755 = vsub.f32 %v255, %v754
        %v756 = vand.u32 %v755, 4294901760
        %v757 = vsub.f32 %v755, %v756
        %v758 = vand.u32 %v757, 4294901760
        %759 = vmatpush2.msra.mxu0 %v758
        %v760 = vand.u32 %v254, 4294901760
        %v761 = vsub.f32 %v254, %v760
        %v762 = vand.u32 %v761, 4294901760
        %v763 = vsub.f32 %v761, %v762
        %v764 = vand.u32 %v763, 4294901760
        %765 = vmatprep.subr.mxu0 %v764
        %v766 = vand.u32 %v253, 4294901760
        %v767 = vsub.f32 %v253, %v766
        %v768 = vand.u32 %v767, 4294901760
        %v769 = vsub.f32 %v767, %v768
        %v770 = vand.u32 %v769, 4294901760
        %771 = vmatpush2.msra.mxu0 %v770
        %v772 = vand.u32 %v252, 4294901760
        %v773 = vsub.f32 %v252, %v772
        %v774 = vand.u32 %v773, 4294901760
        %v775 = vsub.f32 %v773, %v774
        %v776 = vand.u32 %v775, 4294901760
        %777 = vmatprep.subr.mxu0 %v776
        %v778 = vand.u32 %v251, 4294901760
        %v779 = vsub.f32 %v251, %v778
        %v780 = vand.u32 %v779, 4294901760
        %v781 = vsub.f32 %v779, %v780
        %v782 = vand.u32 %v781, 4294901760
        %783 = vmatpush2.msra.mxu0 %v782
        %v784 = vand.u32 %v250, 4294901760
        %v785 = vsub.f32 %v250, %v784
        %v786 = vand.u32 %v785, 4294901760
        %v787 = vsub.f32 %v785, %v786
        %v788 = vand.u32 %v787, 4294901760
        %789 = vmatprep.subr.mxu0 %v788
        %v790 = vand.u32 %v249, 4294901760
        %v791 = vsub.f32 %v249, %v790
        %v792 = vand.u32 %v791, 4294901760
        %v793 = vsub.f32 %v791, %v792
        %v794 = vand.u32 %v793, 4294901760
        %795 = vmatpush2.msra.mxu0 %v794
        %v796 = vand.u32 %v248, 4294901760
        %v797 = vsub.f32 %v248, %v796
        %v798 = vand.u32 %v797, 4294901760
        %v799 = vsub.f32 %v797, %v798
        %v800 = vand.u32 %v799, 4294901760
        %801 = vmatprep.subr.mxu0 %v800
        %v802 = vand.u32 %v247, 4294901760
        %v803 = vsub.f32 %v247, %v802
        %v804 = vand.u32 %v803, 4294901760
        %v805 = vsub.f32 %v803, %v804
        %v806 = vand.u32 %v805, 4294901760
        %807 = vmatpush2.msra.mxu0 %v806
        %v808 = vand.u32 %v246, 4294901760
        %v809 = vsub.f32 %v246, %v808
        %v810 = vand.u32 %v809, 4294901760
        %v811 = vsub.f32 %v809, %v810
        %v812 = vand.u32 %v811, 4294901760
        %813 = vmatprep.subr.mxu0 %v812
        %v814 = vand.u32 %v245, 4294901760
        %v815 = vsub.f32 %v245, %v814
        %v816 = vand.u32 %v815, 4294901760
        %v817 = vsub.f32 %v815, %v816
        %v818 = vand.u32 %v817, 4294901760
        %819 = vmatpush2.msra.mxu0 %v818
        %v820 = vand.u32 %v244, 4294901760
        %v821 = vsub.f32 %v244, %v820
        %v822 = vand.u32 %v821, 4294901760
        %v823 = vsub.f32 %v821, %v822
        %v824 = vand.u32 %v823, 4294901760
        %825 = vmatprep.subr.mxu0 %v824
        %v826 = vand.u32 %v243, 4294901760
        %v827 = vsub.f32 %v243, %v826
        %v828 = vand.u32 %v827, 4294901760
        %v829 = vsub.f32 %v827, %v828
        %v830 = vand.u32 %v829, 4294901760
        %831 = vmatpush2.msra.mxu0 %v830
        %v832 = vand.u32 %v208, 4294901760
        %833 = vmatprep.mubr.f32.mxu0 %v832
        %v834 = vand.u32 %v207, 4294901760
        %835 = vmatmul.mubr.f32.gmra.mxu0 %v834
        %v836 = vpop.f32.mrf.mxu0
        %v837 = vadd.f32 %v428, %v836
        %v838 = vpop.f32.mrf.mxu0
        %v839 = vadd.f32 %v430, %v838
        %v840 = vand.u32 %v210, 4294901760
        %841 = vmatprep.mubr.f32.mxu0 %v840
        %v842 = vand.u32 %v209, 4294901760
        %843 = vmatmul.mubr.f32.gmra.mxu0 %v842
        %v844 = vpop.f32.mrf.mxu0
        %v845 = vadd.f32 %v444, %v844
        %v846 = vpop.f32.mrf.mxu0
        %v847 = vadd.f32 %v446, %v846
        %848 = vdwg.mxu0
        %v849 = vand.u32 %v242, 4294901760
        %v850 = vsub.f32 %v242, %v849
        %851 = vmatprep.subr.mxu0 %v850
        %v852 = vand.u32 %v241, 4294901760
        %v853 = vsub.f32 %v241, %v852
        %854 = vmatpush1.msra.mxu0 %v853
        %v855 = vand.u32 %v240, 4294901760
        %v856 = vsub.f32 %v240, %v855
        %857 = vmatprep.subr.mxu0 %v856
        %v858 = vand.u32 %v239, 4294901760
        %v859 = vsub.f32 %v239, %v858
        %860 = vmatpush1.msra.mxu0 %v859
        %v861 = vand.u32 %v238, 4294901760
        %v862 = vsub.f32 %v238, %v861
        %863 = vmatprep.subr.mxu0 %v862
        %v864 = vand.u32 %v237, 4294901760
        %v865 = vsub.f32 %v237, %v864
        %866 = vmatpush1.msra.mxu0 %v865
        %v867 = vand.u32 %v236, 4294901760
        %v868 = vsub.f32 %v236, %v867
        %869 = vmatprep.subr.mxu0 %v868
        %v870 = vand.u32 %v235, 4294901760
        %v871 = vsub.f32 %v235, %v870
        %872 = vmatpush1.msra.mxu0 %v871
        %v873 = vand.u32 %v234, 4294901760
        %v874 = vsub.f32 %v234, %v873
        %875 = vmatprep.subr.mxu0 %v874
        %v876 = vand.u32 %v233, 4294901760
        %v877 = vsub.f32 %v233, %v876
        %878 = vmatpush1.msra.mxu0 %v877
        %v879 = vand.u32 %v232, 4294901760
        %v880 = vsub.f32 %v232, %v879
        %881 = vmatprep.subr.mxu0 %v880
        %v882 = vand.u32 %v231, 4294901760
        %v883 = vsub.f32 %v231, %v882
        %884 = vmatpush1.msra.mxu0 %v883
        %v885 = vand.u32 %v230, 4294901760
        %v886 = vsub.f32 %v230, %v885
        %887 = vmatprep.subr.mxu0 %v886
        %v888 = vand.u32 %v229, 4294901760
        %v889 = vsub.f32 %v229, %v888
        %890 = vmatpush1.msra.mxu0 %v889
        %v891 = vand.u32 %v228, 4294901760
        %v892 = vsub.f32 %v228, %v891
        %893 = vmatprep.subr.mxu0 %v892
        %v894 = vand.u32 %v227, 4294901760
        %v895 = vsub.f32 %v227, %v894
        %896 = vmatpush1.msra.mxu0 %v895
        %v897 = vand.u32 %v226, 4294901760
        %v898 = vsub.f32 %v226, %v897
        %899 = vmatprep.subr.mxu0 %v898
        %v900 = vand.u32 %v225, 4294901760
        %v901 = vsub.f32 %v225, %v900
        %902 = vmatpush1.msra.mxu0 %v901
        %v903 = vand.u32 %v224, 4294901760
        %v904 = vsub.f32 %v224, %v903
        %905 = vmatprep.subr.mxu0 %v904
        %v906 = vand.u32 %v223, 4294901760
        %v907 = vsub.f32 %v223, %v906
        %908 = vmatpush1.msra.mxu0 %v907
        %v909 = vand.u32 %v222, 4294901760
        %v910 = vsub.f32 %v222, %v909
        %911 = vmatprep.subr.mxu0 %v910
        %v912 = vand.u32 %v221, 4294901760
        %v913 = vsub.f32 %v221, %v912
        %914 = vmatpush1.msra.mxu0 %v913
        %v915 = vand.u32 %v220, 4294901760
        %v916 = vsub.f32 %v220, %v915
        %917 = vmatprep.subr.mxu0 %v916
        %v918 = vand.u32 %v219, 4294901760
        %v919 = vsub.f32 %v219, %v918
        %920 = vmatpush1.msra.mxu0 %v919
        %v921 = vand.u32 %v218, 4294901760
        %v922 = vsub.f32 %v218, %v921
        %923 = vmatprep.subr.mxu0 %v922
        %v924 = vand.u32 %v217, 4294901760
        %v925 = vsub.f32 %v217, %v924
        %926 = vmatpush1.msra.mxu0 %v925
        %v927 = vand.u32 %v216, 4294901760
        %v928 = vsub.f32 %v216, %v927
        %929 = vmatprep.subr.mxu0 %v928
        %v930 = vand.u32 %v215, 4294901760
        %v931 = vsub.f32 %v215, %v930
        %932 = vmatpush1.msra.mxu0 %v931
        %v933 = vand.u32 %v214, 4294901760
        %v934 = vsub.f32 %v214, %v933
        %935 = vmatprep.subr.mxu0 %v934
        %v936 = vand.u32 %v213, 4294901760
        %v937 = vsub.f32 %v213, %v936
        %938 = vmatpush1.msra.mxu0 %v937
        %v939 = vand.u32 %v212, 4294901760
        %v940 = vsub.f32 %v212, %v939
        %941 = vmatprep.subr.mxu0 %v940
        %v942 = vand.u32 %v211, 4294901760
        %v943 = vsub.f32 %v211, %v942
        %944 = vmatpush1.msra.mxu0 %v943
        %v945 = vand.u32 %v274, 4294901760
        %v946 = vsub.f32 %v274, %v945
        %947 = vmatprep.subr.mxu0 %v946
        %v948 = vand.u32 %v273, 4294901760
        %v949 = vsub.f32 %v273, %v948
        %950 = vmatpush2.msra.mxu0 %v949
        %v951 = vand.u32 %v272, 4294901760
        %v952 = vsub.f32 %v272, %v951
        %953 = vmatprep.subr.mxu0 %v952
        %v954 = vand.u32 %v271, 4294901760
        %v955 = vsub.f32 %v271, %v954
        %956 = vmatpush2.msra.mxu0 %v955
        %v957 = vand.u32 %v270, 4294901760
        %v958 = vsub.f32 %v270, %v957
        %959 = vmatprep.subr.mxu0 %v958
        %v960 = vand.u32 %v269, 4294901760
        %v961 = vsub.f32 %v269, %v960
        %962 = vmatpush2.msra.mxu0 %v961
        %v963 = vand.u32 %v268, 4294901760
        %v964 = vsub.f32 %v268, %v963
        %965 = vmatprep.subr.mxu0 %v964
        %v966 = vand.u32 %v267, 4294901760
        %v967 = vsub.f32 %v267, %v966
        %968 = vmatpush2.msra.mxu0 %v967
        %v969 = vand.u32 %v266, 4294901760
        %v970 = vsub.f32 %v266, %v969
        %971 = vmatprep.subr.mxu0 %v970
        %v972 = vand.u32 %v265, 4294901760
        %v973 = vsub.f32 %v265, %v972
        %974 = vmatpush2.msra.mxu0 %v973
        %v975 = vand.u32 %v264, 4294901760
        %v976 = vsub.f32 %v264, %v975
        %977 = vmatprep.subr.mxu0 %v976
        %v978 = vand.u32 %v263, 4294901760
        %v979 = vsub.f32 %v263, %v978
        %980 = vmatpush2.msra.mxu0 %v979
        %v981 = vand.u32 %v262, 4294901760
        %v982 = vsub.f32 %v262, %v981
        %983 = vmatprep.subr.mxu0 %v982
        %v984 = vand.u32 %v261, 4294901760
        %v985 = vsub.f32 %v261, %v984
        %986 = vmatpush2.msra.mxu0 %v985
        %v987 = vand.u32 %v260, 4294901760
        %v988 = vsub.f32 %v260, %v987
        %989 = vmatprep.subr.mxu0 %v988
        %v990 = vand.u32 %v259, 4294901760
        %v991 = vsub.f32 %v259, %v990
        %992 = vmatpush2.msra.mxu0 %v991
        %v993 = vand.u32 %v258, 4294901760
        %v994 = vsub.f32 %v258, %v993
        %995 = vmatprep.subr.mxu0 %v994
        %v996 = vand.u32 %v257, 4294901760
        %v997 = vsub.f32 %v257, %v996
        %998 = vmatpush2.msra.mxu0 %v997
        %v999 = vand.u32 %v256, 4294901760
        %v1000 = vsub.f32 %v256, %v999
        %1001 = vmatprep.subr.mxu0 %v1000
        %v1002 = vand.u32 %v255, 4294901760
        %v1003 = vsub.f32 %v255, %v1002
        %1004 = vmatpush2.msra.mxu0 %v1003
        %v1005 = vand.u32 %v254, 4294901760
        %v1006 = vsub.f32 %v254, %v1005
        %1007 = vmatprep.subr.mxu0 %v1006
        %v1008 = vand.u32 %v253, 4294901760
        %v1009 = vsub.f32 %v253, %v1008
        %1010 = vmatpush2.msra.mxu0 %v1009
        %v1011 = vand.u32 %v252, 4294901760
        %v1012 = vsub.f32 %v252, %v1011
        %1013 = vmatprep.subr.mxu0 %v1012
        %v1014 = vand.u32 %v251, 4294901760
        %v1015 = vsub.f32 %v251, %v1014
        %1016 = vmatpush2.msra.mxu0 %v1015
        %v1017 = vand.u32 %v250, 4294901760
        %v1018 = vsub.f32 %v250, %v1017
        %1019 = vmatprep.subr.mxu0 %v1018
        %v1020 = vand.u32 %v249, 4294901760
        %v1021 = vsub.f32 %v249, %v1020
        %1022 = vmatpush2.msra.mxu0 %v1021
        %v1023 = vand.u32 %v248, 4294901760
        %v1024 = vsub.f32 %v248, %v1023
        %1025 = vmatprep.subr.mxu0 %v1024
        %v1026 = vand.u32 %v247, 4294901760
        %v1027 = vsub.f32 %v247, %v1026
        %1028 = vmatpush2.msra.mxu0 %v1027
        %v1029 = vand.u32 %v246, 4294901760
        %v1030 = vsub.f32 %v246, %v1029
        %1031 = vmatprep.subr.mxu0 %v1030
        %v1032 = vand.u32 %v245, 4294901760
        %v1033 = vsub.f32 %v245, %v1032
        %1034 = vmatpush2.msra.mxu0 %v1033
        %v1035 = vand.u32 %v244, 4294901760
        %v1036 = vsub.f32 %v244, %v1035
        %1037 = vmatprep.subr.mxu0 %v1036
        %v1038 = vand.u32 %v243, 4294901760
        %v1039 = vsub.f32 %v243, %v1038
        %1040 = vmatpush2.msra.mxu0 %v1039
        %v1041 = vand.u32 %v208, 4294901760
        %v1042 = vsub.f32 %v208, %v1041
        %1043 = vmatprep.mubr.f32.mxu0 %v1042
        %v1044 = vand.u32 %v207, 4294901760
        %v1045 = vsub.f32 %v207, %v1044
        %1046 = vmatmul.mubr.f32.gmra.mxu0 %v1045
        %v1047 = vpop.f32.mrf.mxu0
        %v1048 = vadd.f32 %v837, %v1047
        %v1049 = vpop.f32.mrf.mxu0
        %v1050 = vadd.f32 %v839, %v1049
        %v1051 = vand.u32 %v210, 4294901760
        %v1052 = vsub.f32 %v210, %v1051
        %1053 = vmatprep.mubr.f32.mxu0 %v1052
        %v1054 = vand.u32 %v209, 4294901760
        %v1055 = vsub.f32 %v209, %v1054
        %1056 = vmatmul.mubr.f32.gmra.mxu0 %v1055
        %v1057 = vpop.f32.mrf.mxu0
        %v1058 = vadd.f32 %v845, %v1057
        %v1059 = vpop.f32.mrf.mxu0
        %v1060 = vadd.f32 %v847, %v1059
        %1061 = vdwg.mxu0
        %v1062 = vand.u32 %v242, 4294901760
        %1063 = vmatprep.subr.mxu0 %v1062
        %v1064 = vand.u32 %v241, 4294901760
        %1065 = vmatpush1.msra.mxu0 %v1064
        %v1066 = vand.u32 %v240, 4294901760
        %1067 = vmatprep.subr.mxu0 %v1066
        %v1068 = vand.u32 %v239, 4294901760
        %1069 = vmatpush1.msra.mxu0 %v1068
        %v1070 = vand.u32 %v238, 4294901760
        %1071 = vmatprep.subr.mxu0 %v1070
        %v1072 = vand.u32 %v237, 4294901760
        %1073 = vmatpush1.msra.mxu0 %v1072
        %v1074 = vand.u32 %v236, 4294901760
        %1075 = vmatprep.subr.mxu0 %v1074
        %v1076 = vand.u32 %v235, 4294901760
        %1077 = vmatpush1.msra.mxu0 %v1076
        %v1078 = vand.u32 %v234, 4294901760
        %1079 = vmatprep.subr.mxu0 %v1078
        %v1080 = vand.u32 %v233, 4294901760
        %1081 = vmatpush1.msra.mxu0 %v1080
        %v1082 = vand.u32 %v232, 4294901760
        %1083 = vmatprep.subr.mxu0 %v1082
        %v1084 = vand.u32 %v231, 4294901760
        %1085 = vmatpush1.msra.mxu0 %v1084
        %v1086 = vand.u32 %v230, 4294901760
        %1087 = vmatprep.subr.mxu0 %v1086
        %v1088 = vand.u32 %v229, 4294901760
        %1089 = vmatpush1.msra.mxu0 %v1088
        %v1090 = vand.u32 %v228, 4294901760
        %1091 = vmatprep.subr.mxu0 %v1090
        %v1092 = vand.u32 %v227, 4294901760
        %1093 = vmatpush1.msra.mxu0 %v1092
        %v1094 = vand.u32 %v226, 4294901760
        %1095 = vmatprep.subr.mxu0 %v1094
        %v1096 = vand.u32 %v225, 4294901760
        %1097 = vmatpush1.msra.mxu0 %v1096
        %v1098 = vand.u32 %v224, 4294901760
        %1099 = vmatprep.subr.mxu0 %v1098
        %v1100 = vand.u32 %v223, 4294901760
        %1101 = vmatpush1.msra.mxu0 %v1100
        %v1102 = vand.u32 %v222, 4294901760
        %1103 = vmatprep.subr.mxu0 %v1102
        %v1104 = vand.u32 %v221, 4294901760
        %1105 = vmatpush1.msra.mxu0 %v1104
        %v1106 = vand.u32 %v220, 4294901760
        %1107 = vmatprep.subr.mxu0 %v1106
        %v1108 = vand.u32 %v219, 4294901760
        %1109 = vmatpush1.msra.mxu0 %v1108
        %v1110 = vand.u32 %v218, 4294901760
        %1111 = vmatprep.subr.mxu0 %v1110
        %v1112 = vand.u32 %v217, 4294901760
        %1113 = vmatpush1.msra.mxu0 %v1112
        %v1114 = vand.u32 %v216, 4294901760
        %1115 = vmatprep.subr.mxu0 %v1114
        %v1116 = vand.u32 %v215, 4294901760
        %1117 = vmatpush1.msra.mxu0 %v1116
        %v1118 = vand.u32 %v214, 4294901760
        %1119 = vmatprep.subr.mxu0 %v1118
        %v1120 = vand.u32 %v213, 4294901760
        %1121 = vmatpush1.msra.mxu0 %v1120
        %v1122 = vand.u32 %v212, 4294901760
        %1123 = vmatprep.subr.mxu0 %v1122
        %v1124 = vand.u32 %v211, 4294901760
        %1125 = vmatpush1.msra.mxu0 %v1124
        %v1126 = vand.u32 %v274, 4294901760
        %1127 = vmatprep.subr.mxu0 %v1126
        %v1128 = vand.u32 %v273, 4294901760
        %1129 = vmatpush2.msra.mxu0 %v1128
        %v1130 = vand.u32 %v272, 4294901760
        %1131 = vmatprep.subr.mxu0 %v1130
        %v1132 = vand.u32 %v271, 4294901760
        %1133 = vmatpush2.msra.mxu0 %v1132
        %v1134 = vand.u32 %v270, 4294901760
        %1135 = vmatprep.subr.mxu0 %v1134
        %v1136 = vand.u32 %v269, 4294901760
        %1137 = vmatpush2.msra.mxu0 %v1136
        %v1138 = vand.u32 %v268, 4294901760
        %1139 = vmatprep.subr.mxu0 %v1138
        %v1140 = vand.u32 %v267, 4294901760
        %1141 = vmatpush2.msra.mxu0 %v1140
        %v1142 = vand.u32 %v266, 4294901760
        %1143 = vmatprep.subr.mxu0 %v1142
        %v1144 = vand.u32 %v265, 4294901760
        %1145 = vmatpush2.msra.mxu0 %v1144
        %v1146 = vand.u32 %v264, 4294901760
        %1147 = vmatprep.subr.mxu0 %v1146
        %v1148 = vand.u32 %v263, 4294901760
        %1149 = vmatpush2.msra.mxu0 %v1148
        %v1150 = vand.u32 %v262, 4294901760
        %1151 = vmatprep.subr.mxu0 %v1150
        %v1152 = vand.u32 %v261, 4294901760
        %1153 = vmatpush2.msra.mxu0 %v1152
        %v1154 = vand.u32 %v260, 4294901760
        %1155 = vmatprep.subr.mxu0 %v1154
        %v1156 = vand.u32 %v259, 4294901760
        %1157 = vmatpush2.msra.mxu0 %v1156
        %v1158 = vand.u32 %v258, 4294901760
        %1159 = vmatprep.subr.mxu0 %v1158
        %v1160 = vand.u32 %v257, 4294901760
        %1161 = vmatpush2.msra.mxu0 %v1160
        %v1162 = vand.u32 %v256, 4294901760
        %1163 = vmatprep.subr.mxu0 %v1162
        %v1164 = vand.u32 %v255, 4294901760
        %1165 = vmatpush2.msra.mxu0 %v1164
        %v1166 = vand.u32 %v254, 4294901760
        %1167 = vmatprep.subr.mxu0 %v1166
        %v1168 = vand.u32 %v253, 4294901760
        %1169 = vmatpush2.msra.mxu0 %v1168
        %v1170 = vand.u32 %v252, 4294901760
        %1171 = vmatprep.subr.mxu0 %v1170
        %v1172 = vand.u32 %v251, 4294901760
        %1173 = vmatpush2.msra.mxu0 %v1172
        %v1174 = vand.u32 %v250, 4294901760
        %1175 = vmatprep.subr.mxu0 %v1174
        %v1176 = vand.u32 %v249, 4294901760
        %1177 = vmatpush2.msra.mxu0 %v1176
        %v1178 = vand.u32 %v248, 4294901760
        %1179 = vmatprep.subr.mxu0 %v1178
        %v1180 = vand.u32 %v247, 4294901760
        %1181 = vmatpush2.msra.mxu0 %v1180
        %v1182 = vand.u32 %v246, 4294901760
        %1183 = vmatprep.subr.mxu0 %v1182
        %v1184 = vand.u32 %v245, 4294901760
        %1185 = vmatpush2.msra.mxu0 %v1184
        %v1186 = vand.u32 %v244, 4294901760
        %1187 = vmatprep.subr.mxu0 %v1186
        %v1188 = vand.u32 %v243, 4294901760
        %1189 = vmatpush2.msra.mxu0 %v1188
        %v1190 = vand.u32 %v208, 4294901760
        %v1191 = vsub.f32 %v208, %v1190
        %v1192 = vand.u32 %v1191, 4294901760
        %1193 = vmatprep.mubr.f32.mxu0 %v1192
        %v1194 = vand.u32 %v207, 4294901760
        %v1195 = vsub.f32 %v207, %v1194
        %v1196 = vand.u32 %v1195, 4294901760
        %1197 = vmatmul.mubr.f32.gmra.mxu0 %v1196
        %v1198 = vpop.f32.mrf.mxu0
        %v1199 = vadd.f32 %v1048, %v1198
        %v1200 = vpop.f32.mrf.mxu0
        %v1201 = vadd.f32 %v1050, %v1200
        %v1202 = vand.u32 %v210, 4294901760
        %v1203 = vsub.f32 %v210, %v1202
        %v1204 = vand.u32 %v1203, 4294901760
        %1205 = vmatprep.mubr.f32.mxu0 %v1204
        %v1206 = vand.u32 %v209, 4294901760
        %v1207 = vsub.f32 %v209, %v1206
        %v1208 = vand.u32 %v1207, 4294901760
        %1209 = vmatmul.mubr.f32.gmra.mxu0 %v1208
        %v1210 = vpop.f32.mrf.mxu0
        %v1211 = vadd.f32 %v1058, %v1210
        %v1212 = vpop.f32.mrf.mxu0
        %v1213 = vadd.f32 %v1060, %v1212
        %1214 = vdwg.mxu0
        %v1215 = vand.u32 %v242, 4294901760
        %v1216 = vsub.f32 %v242, %v1215
        %v1217 = vand.u32 %v1216, 4294901760
        %1218 = vmatprep.subr.mxu0 %v1217
        %v1219 = vand.u32 %v241, 4294901760
        %v1220 = vsub.f32 %v241, %v1219
        %v1221 = vand.u32 %v1220, 4294901760
        %1222 = vmatpush1.msra.mxu0 %v1221
        %v1223 = vand.u32 %v240, 4294901760
        %v1224 = vsub.f32 %v240, %v1223
        %v1225 = vand.u32 %v1224, 4294901760
        %1226 = vmatprep.subr.mxu0 %v1225
        %v1227 = vand.u32 %v239, 4294901760
        %v1228 = vsub.f32 %v239, %v1227
        %v1229 = vand.u32 %v1228, 4294901760
        %1230 = vmatpush1.msra.mxu0 %v1229
        %v1231 = vand.u32 %v238, 4294901760
        %v1232 = vsub.f32 %v238, %v1231
        %v1233 = vand.u32 %v1232, 4294901760
        %1234 = vmatprep.subr.mxu0 %v1233
        %v1235 = vand.u32 %v237, 4294901760
        %v1236 = vsub.f32 %v237, %v1235
        %v1237 = vand.u32 %v1236, 4294901760
        %1238 = vmatpush1.msra.mxu0 %v1237
        %v1239 = vand.u32 %v236, 4294901760
        %v1240 = vsub.f32 %v236, %v1239
        %v1241 = vand.u32 %v1240, 4294901760
        %1242 = vmatprep.subr.mxu0 %v1241
        %v1243 = vand.u32 %v235, 4294901760
        %v1244 = vsub.f32 %v235, %v1243
        %v1245 = vand.u32 %v1244, 4294901760
        %1246 = vmatpush1.msra.mxu0 %v1245
        %v1247 = vand.u32 %v234, 4294901760
        %v1248 = vsub.f32 %v234, %v1247
        %v1249 = vand.u32 %v1248, 4294901760
        %1250 = vmatprep.subr.mxu0 %v1249
        %v1251 = vand.u32 %v233, 4294901760
        %v1252 = vsub.f32 %v233, %v1251
        %v1253 = vand.u32 %v1252, 4294901760
        %1254 = vmatpush1.msra.mxu0 %v1253
        %v1255 = vand.u32 %v232, 4294901760
        %v1256 = vsub.f32 %v232, %v1255
        %v1257 = vand.u32 %v1256, 4294901760
        %1258 = vmatprep.subr.mxu0 %v1257
        %v1259 = vand.u32 %v231, 4294901760
        %v1260 = vsub.f32 %v231, %v1259
        %v1261 = vand.u32 %v1260, 4294901760
        %1262 = vmatpush1.msra.mxu0 %v1261
        %v1263 = vand.u32 %v230, 4294901760
        %v1264 = vsub.f32 %v230, %v1263
        %v1265 = vand.u32 %v1264, 4294901760
        %1266 = vmatprep.subr.mxu0 %v1265
        %v1267 = vand.u32 %v229, 4294901760
        %v1268 = vsub.f32 %v229, %v1267
        %v1269 = vand.u32 %v1268, 4294901760
        %1270 = vmatpush1.msra.mxu0 %v1269
        %v1271 = vand.u32 %v228, 4294901760
        %v1272 = vsub.f32 %v228, %v1271
        %v1273 = vand.u32 %v1272, 4294901760
        %1274 = vmatprep.subr.mxu0 %v1273
        %v1275 = vand.u32 %v227, 4294901760
        %v1276 = vsub.f32 %v227, %v1275
        %v1277 = vand.u32 %v1276, 4294901760
        %1278 = vmatpush1.msra.mxu0 %v1277
        %v1279 = vand.u32 %v226, 4294901760
        %v1280 = vsub.f32 %v226, %v1279
        %v1281 = vand.u32 %v1280, 4294901760
        %1282 = vmatprep.subr.mxu0 %v1281
        %v1283 = vand.u32 %v225, 4294901760
        %v1284 = vsub.f32 %v225, %v1283
        %v1285 = vand.u32 %v1284, 4294901760
        %1286 = vmatpush1.msra.mxu0 %v1285
        %v1287 = vand.u32 %v224, 4294901760
        %v1288 = vsub.f32 %v224, %v1287
        %v1289 = vand.u32 %v1288, 4294901760
        %1290 = vmatprep.subr.mxu0 %v1289
        %v1291 = vand.u32 %v223, 4294901760
        %v1292 = vsub.f32 %v223, %v1291
        %v1293 = vand.u32 %v1292, 4294901760
        %1294 = vmatpush1.msra.mxu0 %v1293
        %v1295 = vand.u32 %v222, 4294901760
        %v1296 = vsub.f32 %v222, %v1295
        %v1297 = vand.u32 %v1296, 4294901760
        %1298 = vmatprep.subr.mxu0 %v1297
        %v1299 = vand.u32 %v221, 4294901760
        %v1300 = vsub.f32 %v221, %v1299
        %v1301 = vand.u32 %v1300, 4294901760
        %1302 = vmatpush1.msra.mxu0 %v1301
        %v1303 = vand.u32 %v220, 4294901760
        %v1304 = vsub.f32 %v220, %v1303
        %v1305 = vand.u32 %v1304, 4294901760
        %1306 = vmatprep.subr.mxu0 %v1305
        %v1307 = vand.u32 %v219, 4294901760
        %v1308 = vsub.f32 %v219, %v1307
        %v1309 = vand.u32 %v1308, 4294901760
        %1310 = vmatpush1.msra.mxu0 %v1309
        %v1311 = vand.u32 %v218, 4294901760
        %v1312 = vsub.f32 %v218, %v1311
        %v1313 = vand.u32 %v1312, 4294901760
        %1314 = vmatprep.subr.mxu0 %v1313
        %v1315 = vand.u32 %v217, 4294901760
        %v1316 = vsub.f32 %v217, %v1315
        %v1317 = vand.u32 %v1316, 4294901760
        %1318 = vmatpush1.msra.mxu0 %v1317
        %v1319 = vand.u32 %v216, 4294901760
        %v1320 = vsub.f32 %v216, %v1319
        %v1321 = vand.u32 %v1320, 4294901760
        %1322 = vmatprep.subr.mxu0 %v1321
        %v1323 = vand.u32 %v215, 4294901760
        %v1324 = vsub.f32 %v215, %v1323
        %v1325 = vand.u32 %v1324, 4294901760
        %1326 = vmatpush1.msra.mxu0 %v1325
        %v1327 = vand.u32 %v214, 4294901760
        %v1328 = vsub.f32 %v214, %v1327
        %v1329 = vand.u32 %v1328, 4294901760
        %1330 = vmatprep.subr.mxu0 %v1329
        %v1331 = vand.u32 %v213, 4294901760
        %v1332 = vsub.f32 %v213, %v1331
        %v1333 = vand.u32 %v1332, 4294901760
        %1334 = vmatpush1.msra.mxu0 %v1333
        %v1335 = vand.u32 %v212, 4294901760
        %v1336 = vsub.f32 %v212, %v1335
        %v1337 = vand.u32 %v1336, 4294901760
        %1338 = vmatprep.subr.mxu0 %v1337
        %v1339 = vand.u32 %v211, 4294901760
        %v1340 = vsub.f32 %v211, %v1339
        %v1341 = vand.u32 %v1340, 4294901760
        %1342 = vmatpush1.msra.mxu0 %v1341
        %v1343 = vand.u32 %v274, 4294901760
        %v1344 = vsub.f32 %v274, %v1343
        %v1345 = vand.u32 %v1344, 4294901760
        %1346 = vmatprep.subr.mxu0 %v1345
        %v1347 = vand.u32 %v273, 4294901760
        %v1348 = vsub.f32 %v273, %v1347
        %v1349 = vand.u32 %v1348, 4294901760
        %1350 = vmatpush2.msra.mxu0 %v1349
        %v1351 = vand.u32 %v272, 4294901760
        %v1352 = vsub.f32 %v272, %v1351
        %v1353 = vand.u32 %v1352, 4294901760
        %1354 = vmatprep.subr.mxu0 %v1353
        %v1355 = vand.u32 %v271, 4294901760
        %v1356 = vsub.f32 %v271, %v1355
        %v1357 = vand.u32 %v1356, 4294901760
        %1358 = vmatpush2.msra.mxu0 %v1357
        %v1359 = vand.u32 %v270, 4294901760
        %v1360 = vsub.f32 %v270, %v1359
        %v1361 = vand.u32 %v1360, 4294901760
        %1362 = vmatprep.subr.mxu0 %v1361
        %v1363 = vand.u32 %v269, 4294901760
        %v1364 = vsub.f32 %v269, %v1363
        %v1365 = vand.u32 %v1364, 4294901760
        %1366 = vmatpush2.msra.mxu0 %v1365
        %v1367 = vand.u32 %v268, 4294901760
        %v1368 = vsub.f32 %v268, %v1367
        %v1369 = vand.u32 %v1368, 4294901760
        %1370 = vmatprep.subr.mxu0 %v1369
        %v1371 = vand.u32 %v267, 4294901760
        %v1372 = vsub.f32 %v267, %v1371
        %v1373 = vand.u32 %v1372, 4294901760
        %1374 = vmatpush2.msra.mxu0 %v1373
        %v1375 = vand.u32 %v266, 4294901760
        %v1376 = vsub.f32 %v266, %v1375
        %v1377 = vand.u32 %v1376, 4294901760
        %1378 = vmatprep.subr.mxu0 %v1377
        %v1379 = vand.u32 %v265, 4294901760
        %v1380 = vsub.f32 %v265, %v1379
        %v1381 = vand.u32 %v1380, 4294901760
        %1382 = vmatpush2.msra.mxu0 %v1381
        %v1383 = vand.u32 %v264, 4294901760
        %v1384 = vsub.f32 %v264, %v1383
        %v1385 = vand.u32 %v1384, 4294901760
        %1386 = vmatprep.subr.mxu0 %v1385
        %v1387 = vand.u32 %v263, 4294901760
        %v1388 = vsub.f32 %v263, %v1387
        %v1389 = vand.u32 %v1388, 4294901760
        %1390 = vmatpush2.msra.mxu0 %v1389
        %v1391 = vand.u32 %v262, 4294901760
        %v1392 = vsub.f32 %v262, %v1391
        %v1393 = vand.u32 %v1392, 4294901760
        %1394 = vmatprep.subr.mxu0 %v1393
        %v1395 = vand.u32 %v261, 4294901760
        %v1396 = vsub.f32 %v261, %v1395
        %v1397 = vand.u32 %v1396, 4294901760
        %1398 = vmatpush2.msra.mxu0 %v1397
        %v1399 = vand.u32 %v260, 4294901760
        %v1400 = vsub.f32 %v260, %v1399
        %v1401 = vand.u32 %v1400, 4294901760
        %1402 = vmatprep.subr.mxu0 %v1401
        %v1403 = vand.u32 %v259, 4294901760
        %v1404 = vsub.f32 %v259, %v1403
        %v1405 = vand.u32 %v1404, 4294901760
        %1406 = vmatpush2.msra.mxu0 %v1405
        %v1407 = vand.u32 %v258, 4294901760
        %v1408 = vsub.f32 %v258, %v1407
        %v1409 = vand.u32 %v1408, 4294901760
        %1410 = vmatprep.subr.mxu0 %v1409
        %v1411 = vand.u32 %v257, 4294901760
        %v1412 = vsub.f32 %v257, %v1411
        %v1413 = vand.u32 %v1412, 4294901760
        %1414 = vmatpush2.msra.mxu0 %v1413
        %v1415 = vand.u32 %v256, 4294901760
        %v1416 = vsub.f32 %v256, %v1415
        %v1417 = vand.u32 %v1416, 4294901760
        %1418 = vmatprep.subr.mxu0 %v1417
        %v1419 = vand.u32 %v255, 4294901760
        %v1420 = vsub.f32 %v255, %v1419
        %v1421 = vand.u32 %v1420, 4294901760
        %1422 = vmatpush2.msra.mxu0 %v1421
        %v1423 = vand.u32 %v254, 4294901760
        %v1424 = vsub.f32 %v254, %v1423
        %v1425 = vand.u32 %v1424, 4294901760
        %1426 = vmatprep.subr.mxu0 %v1425
        %v1427 = vand.u32 %v253, 4294901760
        %v1428 = vsub.f32 %v253, %v1427
        %v1429 = vand.u32 %v1428, 4294901760
        %1430 = vmatpush2.msra.mxu0 %v1429
        %v1431 = vand.u32 %v252, 4294901760
        %v1432 = vsub.f32 %v252, %v1431
        %v1433 = vand.u32 %v1432, 4294901760
        %1434 = vmatprep.subr.mxu0 %v1433
        %v1435 = vand.u32 %v251, 4294901760
        %v1436 = vsub.f32 %v251, %v1435
        %v1437 = vand.u32 %v1436, 4294901760
        %1438 = vmatpush2.msra.mxu0 %v1437
        %v1439 = vand.u32 %v250, 4294901760
        %v1440 = vsub.f32 %v250, %v1439
        %v1441 = vand.u32 %v1440, 4294901760
        %1442 = vmatprep.subr.mxu0 %v1441
        %v1443 = vand.u32 %v249, 4294901760
        %v1444 = vsub.f32 %v249, %v1443
        %v1445 = vand.u32 %v1444, 4294901760
        %1446 = vmatpush2.msra.mxu0 %v1445
        %v1447 = vand.u32 %v248, 4294901760
        %v1448 = vsub.f32 %v248, %v1447
        %v1449 = vand.u32 %v1448, 4294901760
        %1450 = vmatprep.subr.mxu0 %v1449
        %v1451 = vand.u32 %v247, 4294901760
        %v1452 = vsub.f32 %v247, %v1451
        %v1453 = vand.u32 %v1452, 4294901760
        %1454 = vmatpush2.msra.mxu0 %v1453
        %v1455 = vand.u32 %v246, 4294901760
        %v1456 = vsub.f32 %v246, %v1455
        %v1457 = vand.u32 %v1456, 4294901760
        %1458 = vmatprep.subr.mxu0 %v1457
        %v1459 = vand.u32 %v245, 4294901760
        %v1460 = vsub.f32 %v245, %v1459
        %v1461 = vand.u32 %v1460, 4294901760
        %1462 = vmatpush2.msra.mxu0 %v1461
        %v1463 = vand.u32 %v244, 4294901760
        %v1464 = vsub.f32 %v244, %v1463
        %v1465 = vand.u32 %v1464, 4294901760
        %1466 = vmatprep.subr.mxu0 %v1465
        %v1467 = vand.u32 %v243, 4294901760
        %v1468 = vsub.f32 %v243, %v1467
        %v1469 = vand.u32 %v1468, 4294901760
        %1470 = vmatpush2.msra.mxu0 %v1469
        %v1471 = vand.u32 %v208, 4294901760
        %1472 = vmatprep.mubr.f32.mxu0 %v1471
        %v1473 = vand.u32 %v207, 4294901760
        %1474 = vmatmul.mubr.f32.gmra.mxu0 %v1473
        %v1475 = vpop.f32.mrf.mxu0
        %v1476 = vadd.f32 %v1199, %v1475
        %v1477 = vpop.f32.mrf.mxu0
        %v1478 = vadd.f32 %v1201, %v1477
        %v1479 = vand.u32 %v210, 4294901760
        %1480 = vmatprep.mubr.f32.mxu0 %v1479
        %v1481 = vand.u32 %v209, 4294901760
        %1482 = vmatmul.mubr.f32.gmra.mxu0 %v1481
        %v1483 = vpop.f32.mrf.mxu0
        %v1484 = vadd.f32 %v1211, %v1483
        %v1485 = vpop.f32.mrf.mxu0
        %v1486 = vadd.f32 %v1213, %v1485
        %1487 = vdwg.mxu0
        %v1488 = vand.u32 %v242, 4294901760
        %1489 = vmatprep.subr.mxu0 %v1488
        %v1490 = vand.u32 %v241, 4294901760
        %1491 = vmatpush1.msra.mxu0 %v1490
        %v1492 = vand.u32 %v240, 4294901760
        %1493 = vmatprep.subr.mxu0 %v1492
        %v1494 = vand.u32 %v239, 4294901760
        %1495 = vmatpush1.msra.mxu0 %v1494
        %v1496 = vand.u32 %v238, 4294901760
        %1497 = vmatprep.subr.mxu0 %v1496
        %v1498 = vand.u32 %v237, 4294901760
        %1499 = vmatpush1.msra.mxu0 %v1498
        %v1500 = vand.u32 %v236, 4294901760
        %1501 = vmatprep.subr.mxu0 %v1500
        %v1502 = vand.u32 %v235, 4294901760
        %1503 = vmatpush1.msra.mxu0 %v1502
        %v1504 = vand.u32 %v234, 4294901760
        %1505 = vmatprep.subr.mxu0 %v1504
        %v1506 = vand.u32 %v233, 4294901760
        %1507 = vmatpush1.msra.mxu0 %v1506
        %v1508 = vand.u32 %v232, 4294901760
        %1509 = vmatprep.subr.mxu0 %v1508
        %v1510 = vand.u32 %v231, 4294901760
        %1511 = vmatpush1.msra.mxu0 %v1510
        %v1512 = vand.u32 %v230, 4294901760
        %1513 = vmatprep.subr.mxu0 %v1512
        %v1514 = vand.u32 %v229, 4294901760
        %1515 = vmatpush1.msra.mxu0 %v1514
        %v1516 = vand.u32 %v228, 4294901760
        %1517 = vmatprep.subr.mxu0 %v1516
        %v1518 = vand.u32 %v227, 4294901760
        %1519 = vmatpush1.msra.mxu0 %v1518
        %v1520 = vand.u32 %v226, 4294901760
        %1521 = vmatprep.subr.mxu0 %v1520
        %v1522 = vand.u32 %v225, 4294901760
        %1523 = vmatpush1.msra.mxu0 %v1522
        %v1524 = vand.u32 %v224, 4294901760
        %1525 = vmatprep.subr.mxu0 %v1524
        %v1526 = vand.u32 %v223, 4294901760
        %1527 = vmatpush1.msra.mxu0 %v1526
        %v1528 = vand.u32 %v222, 4294901760
        %1529 = vmatprep.subr.mxu0 %v1528
        %v1530 = vand.u32 %v221, 4294901760
        %1531 = vmatpush1.msra.mxu0 %v1530
        %v1532 = vand.u32 %v220, 4294901760
        %1533 = vmatprep.subr.mxu0 %v1532
        %v1534 = vand.u32 %v219, 4294901760
        %1535 = vmatpush1.msra.mxu0 %v1534
        %v1536 = vand.u32 %v218, 4294901760
        %1537 = vmatprep.subr.mxu0 %v1536
        %v1538 = vand.u32 %v217, 4294901760
        %1539 = vmatpush1.msra.mxu0 %v1538
        %v1540 = vand.u32 %v216, 4294901760
        %1541 = vmatprep.subr.mxu0 %v1540
        %v1542 = vand.u32 %v215, 4294901760
        %1543 = vmatpush1.msra.mxu0 %v1542
        %v1544 = vand.u32 %v214, 4294901760
        %1545 = vmatprep.subr.mxu0 %v1544
        %v1546 = vand.u32 %v213, 4294901760
        %1547 = vmatpush1.msra.mxu0 %v1546
        %v1548 = vand.u32 %v212, 4294901760
        %1549 = vmatprep.subr.mxu0 %v1548
        %v1550 = vand.u32 %v211, 4294901760
        %1551 = vmatpush1.msra.mxu0 %v1550
        %v1552 = vand.u32 %v274, 4294901760
        %1553 = vmatprep.subr.mxu0 %v1552
        %v1554 = vand.u32 %v273, 4294901760
        %1555 = vmatpush2.msra.mxu0 %v1554
        %v1556 = vand.u32 %v272, 4294901760
        %1557 = vmatprep.subr.mxu0 %v1556
        %v1558 = vand.u32 %v271, 4294901760
        %1559 = vmatpush2.msra.mxu0 %v1558
        %v1560 = vand.u32 %v270, 4294901760
        %1561 = vmatprep.subr.mxu0 %v1560
        %v1562 = vand.u32 %v269, 4294901760
        %1563 = vmatpush2.msra.mxu0 %v1562
        %v1564 = vand.u32 %v268, 4294901760
        %1565 = vmatprep.subr.mxu0 %v1564
        %v1566 = vand.u32 %v267, 4294901760
        %1567 = vmatpush2.msra.mxu0 %v1566
        %v1568 = vand.u32 %v266, 4294901760
        %1569 = vmatprep.subr.mxu0 %v1568
        %v1570 = vand.u32 %v265, 4294901760
        %1571 = vmatpush2.msra.mxu0 %v1570
        %v1572 = vand.u32 %v264, 4294901760
        %1573 = vmatprep.subr.mxu0 %v1572
        %v1574 = vand.u32 %v263, 4294901760
        %1575 = vmatpush2.msra.mxu0 %v1574
        %v1576 = vand.u32 %v262, 4294901760
        %1577 = vmatprep.subr.mxu0 %v1576
        %v1578 = vand.u32 %v261, 4294901760
        %1579 = vmatpush2.msra.mxu0 %v1578
        %v1580 = vand.u32 %v260, 4294901760
        %1581 = vmatprep.subr.mxu0 %v1580
        %v1582 = vand.u32 %v259, 4294901760
        %1583 = vmatpush2.msra.mxu0 %v1582
        %v1584 = vand.u32 %v258, 4294901760
        %1585 = vmatprep.subr.mxu0 %v1584
        %v1586 = vand.u32 %v257, 4294901760
        %1587 = vmatpush2.msra.mxu0 %v1586
        %v1588 = vand.u32 %v256, 4294901760
        %1589 = vmatprep.subr.mxu0 %v1588
        %v1590 = vand.u32 %v255, 4294901760
        %1591 = vmatpush2.msra.mxu0 %v1590
        %v1592 = vand.u32 %v254, 4294901760
        %1593 = vmatprep.subr.mxu0 %v1592
        %v1594 = vand.u32 %v253, 4294901760
        %1595 = vmatpush2.msra.mxu0 %v1594
        %v1596 = vand.u32 %v252, 4294901760
        %1597 = vmatprep.subr.mxu0 %v1596
        %v1598 = vand.u32 %v251, 4294901760
        %1599 = vmatpush2.msra.mxu0 %v1598
        %v1600 = vand.u32 %v250, 4294901760
        %1601 = vmatprep.subr.mxu0 %v1600
        %v1602 = vand.u32 %v249, 4294901760
        %1603 = vmatpush2.msra.mxu0 %v1602
        %v1604 = vand.u32 %v248, 4294901760
        %1605 = vmatprep.subr.mxu0 %v1604
        %v1606 = vand.u32 %v247, 4294901760
        %1607 = vmatpush2.msra.mxu0 %v1606
        %v1608 = vand.u32 %v246, 4294901760
        %1609 = vmatprep.subr.mxu0 %v1608
        %v1610 = vand.u32 %v245, 4294901760
        %1611 = vmatpush2.msra.mxu0 %v1610
        %v1612 = vand.u32 %v244, 4294901760
        %1613 = vmatprep.subr.mxu0 %v1612
        %v1614 = vand.u32 %v243, 4294901760
        %1615 = vmatpush2.msra.mxu0 %v1614
        %v1616 = vand.u32 %v208, 4294901760
        %1617 = vmatprep.mubr.f32.mxu0 %v1616
        %v1618 = vand.u32 %v207, 4294901760
        %1619 = vmatmul.mubr.f32.gmra.mxu0 %v1618
        %v1620 = vpop.f32.mrf.mxu0
        %v1621 = vadd.f32 %v1476, %v1620
        %v1622 = vpop.f32.mrf.mxu0
        %v1623 = vadd.f32 %v1478, %v1622
        %v1624 = vand.u32 %v210, 4294901760
        %1625 = vmatprep.mubr.f32.mxu0 %v1624
        %v1626 = vand.u32 %v209, 4294901760
        %1627 = vmatmul.mubr.f32.gmra.mxu0 %v1626
        %v1628 = vpop.f32.mrf.mxu0
        %v1629 = vadd.f32 %v1484, %v1628
        %v1630 = vpop.f32.mrf.mxu0
        %v1631 = vadd.f32 %v1486, %v1630
        %1632 = vdwg.mxu0
        %1633 = vst [vmem:[%s204] sm:$0xff] %v1621
        %1634 = vst [vmem:[%s204 + $0x8] sm:$0xff] %v1623
        %1635 = vst [vmem:[%s204 + $0x10] sm:$0xff] %v1629
        %1636 = vst [vmem:[%s204 + $0x18] sm:$0xff] %v1631
        %s1637 = sand.u32 %s97, 1
        %s1638 = scalar_lea.sflag [#allocation4], %s1637
        %s1639 = sand.u32 %s97, 1
        %s1640 = smul.addr %s1639, 32
        %s1641 = scalar_lea.vmem [#allocation7], %s1640
        // Predicated region
        $region41: #{tpu_custom_call.1} parent=31 // pred_check
          %p1642 = pneg %p107
        $region42: #{tpu_custom_call.1} parent=31 // pred_check_branch
          %1644 = sbr.rel (%p1642) target = $region44
        $region43: #{tpu_custom_call.1} parent=31 // pred_region
          %s1645 = smul.u32 2, %s21
          %s1647 = ssub.s32 512, 512
          %1648 = vsyncadd %s1638, %s1647
          %s1649 = smul.addr %s1645, 2
          %s1650 = smul.addr %s1649, 128
          %s1651 = scalar_lea.hbm %s3, %s1650
          %s1652 = sshll.u32 %s1641, 4
          %s1653 = int_to_ptr.vmem [resolvable:$true] %s1652
          %1658 = dma.vmem_to_hbm [thread:$0]  %s1653, 512, %s1651, %s1638, 256, 256, 16
        $region44: #{tpu_custom_call.1} parent=31 // pred_fallthru
          _
      $region32: #{tpu_custom_call.1} parent=5 // pred_fallthru
        _
      %p1659 = scmp.le.s32.totalorder 2, %s16
      // Predicated region
      $region45: #{tpu_custom_call.1} parent=5 // pred_check
        %p1660 = pneg %p1659
      $region46: #{tpu_custom_call.1} parent=5 // pred_check_branch
        %1662 = sbr.rel (%p1660) target = $region48
      $region47: #{tpu_custom_call.1} parent=5 // pred_region
        %s1663 = ssub.s32 %s16, 2
        // Predicated region
        $region49: #{tpu_custom_call.1} parent=47 // pred_check
          %p1664 = pneg %p113
        $region50: #{tpu_custom_call.1} parent=47 // pred_check_branch
          %1666 = sbr.rel (%p1664) target = $region52
        $region51: #{tpu_custom_call.1} parent=47 // pred_region
          %s1667 = sand.u32 %s98, 1
          %s1668 = scalar_lea.sflag [#allocation4], %s1667
          %s1669 = sand.u32 %s98, 1
          %s1670 = smul.addr %s1669, 32
          %s1671 = scalar_lea.vmem [#allocation7], %s1670
          %1672 = dma.done %s1668, 512
        $region52: #{tpu_custom_call.1} parent=47 // pred_fallthru
          _
      $region48: #{tpu_custom_call.1} parent=5 // pred_fallthru
        _
    $region6: #{tpu_custom_call.1} parent=1 // loop_footer
      %s20 = sadd.s32 1, %s16
    $region7: #{tpu_custom_call.1} parent=1 // loop_footer_branch
      %15 = sbr.rel target = $region3
    $region8: #{tpu_custom_call.1} parent=1 // loop_exit
      _
    %1673 = vsyncpa [#allocation3], 1
    %s1674 = scalar_lea.sflag [#allocation3], 1
    %1675 = vsyncpa %s1674, 1
    %1676 = vsyncpa [#allocation6], 1
    %1677 = vsyncpa [#allocation4], 1
    %s1678 = scalar_lea.sflag [#allocation4], 1
    %1679 = vsyncpa %s1678, 1

</llo_original>
